<compile_context>
chip_gen: v7x
topology: tpu7x:2x2x1
jax: 0.10.0
libtpu: 0.0.40
codegen_flags: <defaults>
</compile_context>

<pallas_src>
import functools

import jax
import jax.numpy as jnp
from jax.experimental import pallas as pl
from jax.experimental.pallas import tpu as pltpu


def cnn_kernel(x_ref, w_ref, b_ref, o_ref, im2col_ref, *,
               K, E_in, L, L_out, L_out_pad, Bt, matmul_dtype):
    """One batch tile: bulk im2col -> one MXU matmul -> max over time -> bias+ReLU.

    x_ref:      (Bt, E_in*L)              activation tile, flattened NCW rows
    w_ref:      (K*E_in, E_pad)           conv weight (row k*E_in + c), matmul_dtype
    b_ref:      (1, E_pad)                bias, f32
    o_ref:      (Bt, E_pad)               output tile (f32)
    im2col_ref: (Bt, L_out_pad, K*E_in)   VMEM scratch in matmul_dtype
    """
    E_pad = w_ref.shape[1]

    # One bulk transpose of the whole tile: (Bt, E_in, L) -> (Bt, L, E_in),
    # cast once to the MXU operand dtype.
    x_t = jnp.transpose(
        x_ref[...].reshape(Bt, E_in, L), (0, 2, 1)).astype(matmul_dtype)

    # K tap-writes covering all batch rows at once:
    # im2col[b, t, k*E_in + c] = x[b, c, t + k]
    for k in range(K):
        im2col_ref[:, :L_out, k * E_in:(k + 1) * E_in] = x_t[:, k:k + L_out, :]

    # Zero the sublane-pad time rows so the matmul over them is well defined
    # (they are additionally masked to -inf before the max).
    if L_out_pad > L_out:
        im2col_ref[:, L_out:, :] = jnp.zeros(
            (Bt, L_out_pad - L_out, K * E_in), matmul_dtype)

    # One well-filled MXU matmul: M = Bt*L_out_pad, contraction = K*E_in, N = E_pad.
    acc = jnp.dot(
        im2col_ref[...].reshape(Bt * L_out_pad, K * E_in),
        w_ref[...],
        preferred_element_type=jnp.float32,
    ).reshape(Bt, L_out_pad, E_pad)

    # Mask pad time rows to -inf, then a single bulk max over the time axis.
    if L_out_pad > L_out:
        t_idx = jax.lax.broadcasted_iota(jnp.int32, (Bt, L_out_pad, E_pad), 1)
        acc = jnp.where(t_idx < L_out, acc, -jnp.inf)
    m = jnp.max(acc, axis=1)                                   # (Bt, E_pad), f32

    # bias + ReLU AFTER the max: max_t relu(s_t + b) == relu(max_t s_t + b).
    o_ref[...] = jnp.maximum(m + b_ref[...], 0.0).astype(o_ref.dtype)


def cnn_forward(x_ncw, weight, bias, kernel_size, *,
                matmul_dtype=jnp.bfloat16, batch_tile=None,
                out_dtype=jnp.float32):
    """Forward pass of the CS224N CNN module.

    x_ncw:  (B, E_in, L)   -- PyTorch Conv1d input layout (bz, embed, max_word_len)
    weight: (E_out, E_in, K)
    bias:   (E_out,)
    returns (B, E_out) f32 -- max over time of ReLU(conv1d(x))
    """
    B, E_in, L = x_ncw.shape
    E_out = weight.shape[0]
    K = kernel_size
    L_out = L - K + 1
    assert L_out >= 1, "kernel_size must be <= max_word_length"

    # Pad the time axis of the im2col matrix to the matmul dtype's sublane
    # packing so the (Bt, L_out_pad) -> Bt*L_out_pad merge before the dot is free.
    sub = 8 * (4 // jnp.dtype(matmul_dtype).itemsize)          # 8 f32 / 16 bf16
    L_out_pad = pl.cdiv(L_out, sub) * sub

    # Lane-dense output: pad output channels to a multiple of 128.
    E_pad = pl.cdiv(E_out, 128) * 128

    # Batch tile: sublane-aligned (multiple of 8), capped so the per-step
    # working set (x tile + bf16 im2col + f32 acc + out, double-buffered input)
    # stays a few MiB -- comfortably under v5e's 16 MiB / v7x's 32 MiB scoped
    # VMEM defaults while leaving >= 2 grid steps on realistic batches.
    if batch_tile is None:
        batch_tile = min(128, pl.cdiv(B, 8) * 8)
    Bt = batch_tile
    assert Bt % 8 == 0 or Bt == B, "batch_tile must be a multiple of 8 (or == B)"
    B_pad = pl.cdiv(B, Bt) * Bt
    grid = B_pad // Bt

    # Activation DMA layout: flatten NCW rows (free, contiguous reshape) and
    # zero-pad the batch to a whole number of tiles.  For production, feed x
    # in bf16 upstream to also halve the activation DMA bytes.
    x_flat = x_ncw.reshape(B, E_in * L)
    if B_pad > B:
        x_flat = jnp.pad(x_flat, ((0, B_pad - B), (0, 0)))

    # Weight: (E_out, E_in, K) -> (K*E_in, E_pad), row index k*E_in + c,
    # matching the im2col column layout; one-time cast to the MXU dtype.
    w2 = jnp.transpose(weight, (2, 1, 0)).reshape(K * E_in, E_out)
    w2 = jnp.pad(w2, ((0, 0), (0, E_pad - E_out))).astype(matmul_dtype)
    b2 = jnp.pad(bias, (0, E_pad - E_out)).reshape(1, E_pad).astype(jnp.float32)

    kern = functools.partial(
        cnn_kernel, K=K, E_in=E_in, L=L, L_out=L_out, L_out_pad=L_out_pad,
        Bt=Bt, matmul_dtype=matmul_dtype)

    flops = 2 * B_pad * L_out_pad * (K * E_in) * E_pad
    bytes_accessed = (x_flat.size * x_flat.dtype.itemsize
                      + w2.size * w2.dtype.itemsize
                      + b2.size * b2.dtype.itemsize
                      + B_pad * E_pad * jnp.dtype(out_dtype).itemsize)
    cost = pl.CostEstimate(flops=flops, transcendentals=0,
                           bytes_accessed=bytes_accessed)

    out = pl.pallas_call(
        kern,
        out_shape=jax.ShapeDtypeStruct((B_pad, E_pad), out_dtype),
        grid=(grid,),
        in_specs=[
            pl.BlockSpec((Bt, E_in * L), lambda i: (i, 0)),
            pl.BlockSpec((K * E_in, E_pad), lambda i: (0, 0)),
            pl.BlockSpec((1, E_pad), lambda i: (0, 0)),
        ],
        out_specs=pl.BlockSpec((Bt, E_pad), lambda i: (i, 0)),
        scratch_shapes=[pltpu.VMEM((Bt, L_out_pad, K * E_in), matmul_dtype)],
        compiler_params=pltpu.CompilerParams(
            dimension_semantics=("parallel",)),
        cost_estimate=cost,
    )(x_flat, w2, b2)

    return out[:B, :E_out]


def ref_forward(x_ncw, weight, bias, K):
    """Pure-JAX reference matching PyTorch Conv1d -> ReLU -> max(dim=2)."""
    B, E_in, L = x_ncw.shape
    L_out = L - K + 1
    cols = jnp.stack([x_ncw[:, :, k:k + L_out] for k in range(K)], axis=-1)  # (B,C,L_out,K)
    conv = jnp.einsum("bclk,ock->bol", cols, weight,
                      precision=jax.lax.Precision.HIGHEST) + bias[None, :, None]
    return jnp.max(jax.nn.relu(conv), axis=2)


if __name__ == "__main__":
    B = 2            # batch (bz)
    E = 32           # embed_size (in_channels == out_channels)
    L = 16           # max_word_length
    K = 5            # kernel_size

    key = jax.random.PRNGKey(0)
    kx, kw, kb = jax.random.split(key, 3)

    x = jax.random.normal(kx, (B, E, L), dtype=jnp.float32)        # (bz, embed, max_word_len)
    bound = 1.0 / (E * K) ** 0.5                                   # nn.Conv1d default init range
    weight = jax.random.uniform(kw, (E, E, K), jnp.float32, -bound, bound)
    bias = jax.random.uniform(kb, (E,), jnp.float32, -bound, bound)

    ref = ref_forward(x, weight, bias, K)

    # f32 MXU-operand path (tight-tolerance semantics check).
    out_f32 = jax.block_until_ready(
        cnn_forward(x, weight, bias, K, matmul_dtype=jnp.float32))
    assert out_f32.shape == (B, E)
    assert jnp.allclose(out_f32, ref, atol=1e-4, rtol=1e-4), "f32 mismatch vs reference"

    # Performance path: bf16 MXU operands, f32 accumulation.
    out_bf16 = jax.block_until_ready(
        cnn_forward(x, weight, bias, K, matmul_dtype=jnp.bfloat16))
    assert out_bf16.shape == (B, E)
    assert jnp.allclose(out_bf16, ref, atol=3e-2, rtol=3e-2), "bf16 mismatch vs reference"

    print("KERNEL_OK")
</pallas_src>

<mosaic_0001>
module attributes {stable_mosaic.version = 11 : i64} {
  func.func @cnn_kernel(%arg0: i32, %arg1: memref<8x512xf32, #tpu.memory_space<vmem>>, %arg2: memref<160x128xf32, #tpu.memory_space<vmem>>, %arg3: memref<1x128xf32, #tpu.memory_space<vmem>>, %arg4: memref<8x128xf32, #tpu.memory_space<vmem>>, %arg5: memref<8x16x160xf32, #tpu.memory_space<vmem>>) attributes {dimension_semantics = [#tpu.dimension_semantics<parallel>], iteration_bounds = array<i64: 1>, scalar_prefetch = 0 : i64, scratch_operands = 1 : i64, tpu.core_type = #tpu.core_type<tc>, window_params = [{transform_indices = @transform_0, window_bounds = array<i64: 8, 512>}, {pipeline_mode = #tpu.pipeline_mode<synchronous>, transform_indices = @transform_1, window_bounds = array<i64: 160, 128>}, {pipeline_mode = #tpu.pipeline_mode<synchronous>, transform_indices = @transform_2, window_bounds = array<i64: 1, 128>}, {transform_indices = @transform_3, window_bounds = array<i64: 8, 128>}]} {
    %c0 = arith.constant 0 : index
    %c0_0 = arith.constant 0 : index
    %0 = vector.load %arg1[%c0, %c0_0] : memref<8x512xf32, #tpu.memory_space<vmem>>, vector<8x512xf32>
    %1 = vector.shape_cast %0 : vector<8x512xf32> to vector<8x32x16xf32>
    %2 = tpu.transpose %1, [0, 2, 1] : vector<8x32x16xf32> -> vector<8x16x32xf32>
    %3 = vector.extract_strided_slice %2 {offsets = [0, 0, 0], sizes = [8, 12, 32], strides = [1, 1, 1]} : vector<8x16x32xf32> to vector<8x12x32xf32>
    %c0_1 = arith.constant 0 : index
    %c0_2 = arith.constant 0 : index
    %c0_3 = arith.constant 0 : index
    %4 = vector.load %arg5[%c0_1, %c0_2, %c0_3] : memref<8x16x160xf32, #tpu.memory_space<vmem>>, vector<8x12x32xf32>
    tpu.vector_store %arg5[%c0_1, %c0_2, %c0_3], %3 {strides = array<i32>} : memref<8x16x160xf32, #tpu.memory_space<vmem>>, vector<8x12x32xf32>,
    %5 = vector.extract_strided_slice %2 {offsets = [0, 1, 0], sizes = [8, 12, 32], strides = [1, 1, 1]} : vector<8x16x32xf32> to vector<8x12x32xf32>
    %c0_4 = arith.constant 0 : index
    %c0_5 = arith.constant 0 : index
    %c32 = arith.constant 32 : index
    %6 = vector.load %arg5[%c0_4, %c0_5, %c32] : memref<8x16x160xf32, #tpu.memory_space<vmem>>, vector<8x12x32xf32>
    tpu.vector_store %arg5[%c0_4, %c0_5, %c32], %5 {strides = array<i32>} : memref<8x16x160xf32, #tpu.memory_space<vmem>>, vector<8x12x32xf32>,
    %7 = vector.extract_strided_slice %2 {offsets = [0, 2, 0], sizes = [8, 12, 32], strides = [1, 1, 1]} : vector<8x16x32xf32> to vector<8x12x32xf32>
    %c0_6 = arith.constant 0 : index
    %c0_7 = arith.constant 0 : index
    %c64 = arith.constant 64 : index
    %8 = vector.load %arg5[%c0_6, %c0_7, %c64] : memref<8x16x160xf32, #tpu.memory_space<vmem>>, vector<8x12x32xf32>
    tpu.vector_store %arg5[%c0_6, %c0_7, %c64], %7 {strides = array<i32>} : memref<8x16x160xf32, #tpu.memory_space<vmem>>, vector<8x12x32xf32>,
    %9 = vector.extract_strided_slice %2 {offsets = [0, 3, 0], sizes = [8, 12, 32], strides = [1, 1, 1]} : vector<8x16x32xf32> to vector<8x12x32xf32>
    %c0_8 = arith.constant 0 : index
    %c0_9 = arith.constant 0 : index
    %c96 = arith.constant 96 : index
    %10 = vector.load %arg5[%c0_8, %c0_9, %c96] : memref<8x16x160xf32, #tpu.memory_space<vmem>>, vector<8x12x32xf32>
    tpu.vector_store %arg5[%c0_8, %c0_9, %c96], %9 {strides = array<i32>} : memref<8x16x160xf32, #tpu.memory_space<vmem>>, vector<8x12x32xf32>,
    %11 = vector.extract_strided_slice %2 {offsets = [0, 4, 0], sizes = [8, 12, 32], strides = [1, 1, 1]} : vector<8x16x32xf32> to vector<8x12x32xf32>
    %c0_10 = arith.constant 0 : index
    %c0_11 = arith.constant 0 : index
    %c128 = arith.constant 128 : index
    %12 = vector.load %arg5[%c0_10, %c0_11, %c128] : memref<8x16x160xf32, #tpu.memory_space<vmem>>, vector<8x12x32xf32>
    tpu.vector_store %arg5[%c0_10, %c0_11, %c128], %11 {strides = array<i32>} : memref<8x16x160xf32, #tpu.memory_space<vmem>>, vector<8x12x32xf32>,
    %cst = arith.constant 0.000000e+00 : f32
    %13 = vector.broadcast %cst : f32 to vector<8x4x160xf32>
    %c0_12 = arith.constant 0 : index
    %c12 = arith.constant 12 : index
    %c0_13 = arith.constant 0 : index
    %14 = vector.load %arg5[%c0_12, %c12, %c0_13] : memref<8x16x160xf32, #tpu.memory_space<vmem>>, vector<8x4x160xf32>
    tpu.vector_store %arg5[%c0_12, %c12, %c0_13], %13 {strides = array<i32>} : memref<8x16x160xf32, #tpu.memory_space<vmem>>, vector<8x4x160xf32>,
    %c0_14 = arith.constant 0 : index
    %c0_15 = arith.constant 0 : index
    %c0_16 = arith.constant 0 : index
    %15 = vector.load %arg5[%c0_14, %c0_15, %c0_16] : memref<8x16x160xf32, #tpu.memory_space<vmem>>, vector<8x16x160xf32>
    %16 = vector.shape_cast %15 : vector<8x16x160xf32> to vector<128x160xf32>
    %c0_17 = arith.constant 0 : index
    %c0_18 = arith.constant 0 : index
    %17 = vector.load %arg2[%c0_17, %c0_18] : memref<160x128xf32, #tpu.memory_space<vmem>>, vector<160x128xf32>
    %cst_19 = arith.constant dense<0.000000e+00> : vector<128x128xf32>
    %18 = tpu.matmul %16, %17, %cst_19 {dimension_numbers = #tpu.dot_dimension_numbers<[1], [0], [0], [1], [0, 0, 1, 1], [], []>} : vector<128x160xf32>, vector<160x128xf32>, vector<128x128xf32> -> vector<128x128xf32>
    %19 = vector.shape_cast %18 : vector<128x128xf32> to vector<8x16x128xf32>
    %20 = tpu.iota {dimensions = array<i32: 1>} : vector<8x16x128xi32>
    %c12_i32 = arith.constant 12 : i32
    %21 = vector.broadcast %c12_i32 : i32 to vector<8x16x128xi32>
    %22 = arith.cmpi slt, %20, %21 : vector<8x16x128xi32>
    %cst_20 = arith.constant 0xFF800000 : f32
    %23 = vector.broadcast %cst_20 : f32 to vector<8x16x128xf32>
    %24 = arith.select %22, %19, %23 : vector<8x16x128xi1>, vector<8x16x128xf32>
    %cst_21 = arith.constant dense<0xFF800000> : vector<8x128xf32>
    %25 = vector.multi_reduction <maximumf>, %24, %cst_21 [1] : vector<8x16x128xf32> to vector<8x128xf32>
    %c0_22 = arith.constant 0 : index
    %c0_23 = arith.constant 0 : index
    %26 = vector.load %arg3[%c0_22, %c0_23] : memref<1x128xf32, #tpu.memory_space<vmem>>, vector<1x128xf32>
    %27 = vector.broadcast %26 : vector<1x128xf32> to vector<8x128xf32>
    %28 = arith.addf %25, %27 : vector<8x128xf32>
    %cst_24 = arith.constant 0.000000e+00 : f32
    %29 = vector.broadcast %cst_24 : f32 to vector<8x128xf32>
    %30 = arith.maximumf %28, %29 : vector<8x128xf32>
    %c0_25 = arith.constant 0 : index
    %c0_26 = arith.constant 0 : index
    %31 = vector.load %arg4[%c0_25, %c0_26] : memref<8x128xf32, #tpu.memory_space<vmem>>, vector<8x128xf32>
    tpu.vector_store %arg4[%c0_25, %c0_26], %30 {strides = array<i32>} : memref<8x128xf32, #tpu.memory_space<vmem>>, vector<8x128xf32>,
    return
  }
  func.func @transform_0(%arg0: i32) -> (i32, i32) {
    %c0_i32 = arith.constant 0 : i32
    %c0_i32_0 = arith.constant 0 : i32
    return %arg0, %c0_i32 : i32, i32
  }
  func.func @transform_1(%arg0: i32) -> (i32, i32) {
    %c0_i32 = arith.constant 0 : i32
    %c0_i32_0 = arith.constant 0 : i32
    %c0_i32_1 = arith.constant 0 : i32
    return %c0_i32, %c0_i32_0 : i32, i32
  }
  func.func @transform_2(%arg0: i32) -> (i32, i32) {
    %c0_i32 = arith.constant 0 : i32
    %c0_i32_0 = arith.constant 0 : i32
    %c0_i32_1 = arith.constant 0 : i32
    return %c0_i32, %c0_i32_0 : i32, i32
  }
  func.func @transform_3(%arg0: i32) -> (i32, i32) {
    %c0_i32 = arith.constant 0 : i32
    %c0_i32_0 = arith.constant 0 : i32
    return %arg0, %c0_i32 : i32, i32
  }
}

</mosaic_0001>

<llo_original>
// kernel: tpu_custom_call.1
$region0: #{tpu_custom_call.1}
  #allocation0 [shape = 'u32[]', space=smem, size = 0x4, offset = 0x4, fixed_abs, tag = 'smem constant byte address 0x4 - core index']
  #allocation1 [shape = 'u32[144,128]{1,0:T(1,128)}', space=vmem, size = 0x12000, scoped, tag = 'internal scratch']
  #allocation2 [shape = 'f32[8,16,160]{2,1,0:T(8,128)}', space=vmem, size = 0x20000, scoped, tag = 'scratch operand']
  %s0 = inlined_call_operand.hbm [shape: f32[8,512], index: 0, kind: input, shape index: {}]
  %s1 = inlined_call_operand.hbm [shape: f32[160,128], index: 1, kind: input, shape index: {}]
  %s2 = inlined_call_operand.vmem [shape: f32[1,128], index: 2, kind: input, shape index: {}]
  %s3 = inlined_call_operand.hbm [shape: f32[8,128], index: 3, kind: output, shape index: {}]
  %s4 = sld [smem:[#allocation0]]
  $region30: #{tpu_custom_call.1} parent=0
    _
  %s6 = ssub.s32 1, %s4
  %s7 = scalar_select 0, %s6, %s4
  $region1: #{tpu_custom_call.1} parent=0
    #allocation3 [shape = 'u8[16384]{0}', space=vmem, size = 0x4000, scoped, tag = 'input window, operand 0, single buffered']
    #allocation4 [shape = 's32[1]{0}', space=sflag, size = 0x4, scoped, tag = 'scoped memory for tpu_custom_call.1']
    #allocation5 [shape = 's32[1]{0}', space=sflag, size = 0x4, scoped, tag = 'scoped memory for tpu_custom_call.1']
    #allocation6 [shape = 'u8[81920]{0}', space=vmem, size = 0x14000, scoped, tag = 'input window, operand 1, single buffered']
    #allocation7 [shape = 's32[1]{0}', space=sflag, size = 0x4, scoped, tag = 'scoped memory for tpu_custom_call.1']
    #allocation8 [shape = 'u8[4096]{0}', space=vmem, size = 0x1000, scoped, tag = 'output window, operand 0, single buffered']
    %8 = vsyncpa [#allocation4], 0
    %9 = vsyncpa [#allocation7], 0
    %10 = vsyncpa [#allocation5], 0
    // Predicated region
    $region2: #{tpu_custom_call.1} parent=1 // pred_check
      _
    $region3: #{tpu_custom_call.1} parent=1 // pred_check_branch
      %12 = sbr.rel (0) target = $region5
    $region4: #{tpu_custom_call.1} parent=1 // pred_region
      %s14 = ssub.s32 512, 512
      %15 = vsyncadd [#allocation4], %s14
      %s17 = sshll.u32 [#allocation3], 4
      %s18 = int_to_ptr.vmem [resolvable:$true] %s17
      %20 = dma.hbm_to_vmem [thread:$0]  %s0, 512, %s18, [#allocation4]
    $region5: #{tpu_custom_call.1} parent=1 // pred_fallthru
      _
    // Predicated region
    $region6: #{tpu_custom_call.1} parent=1 // pred_check
      _
    $region7: #{tpu_custom_call.1} parent=1 // pred_check_branch
      %22 = sbr.rel (0) target = $region9
    $region8: #{tpu_custom_call.1} parent=1 // pred_region
      %s24 = ssub.s32 2560, 2560
      %25 = vsyncadd [#allocation7], %s24
      %s26 = sshll.u32 [#allocation6], 4
      %s27 = int_to_ptr.vmem [resolvable:$true] %s26
      %32 = dma.hbm_to_vmem [thread:$0]  %s1, 2560, %s27, [#allocation7], 128, 128, 8
    $region9: #{tpu_custom_call.1} parent=1 // pred_fallthru
      _
    // Predicated region
    $region10: #{tpu_custom_call.1} parent=1 // pred_check
      _
    $region11: #{tpu_custom_call.1} parent=1 // pred_check_branch
      %34 = sbr.rel (0) target = $region13
    $region12: #{tpu_custom_call.1} parent=1 // pred_region
      _
    $region13: #{tpu_custom_call.1} parent=1 // pred_fallthru
      _
    // Predicated region
    $region14: #{tpu_custom_call.1} parent=1 // pred_check
      _
    $region15: #{tpu_custom_call.1} parent=1 // pred_check_branch
      %36 = sbr.rel (0) target = $region17
    $region16: #{tpu_custom_call.1} parent=1 // pred_region
      %37 = dma.done [#allocation4], 512
    $region17: #{tpu_custom_call.1} parent=1 // pred_fallthru
      _
    // Predicated region
    $region18: #{tpu_custom_call.1} parent=1 // pred_check
      _
    $region19: #{tpu_custom_call.1} parent=1 // pred_check_branch
      %39 = sbr.rel (0) target = $region21
    $region20: #{tpu_custom_call.1} parent=1 // pred_region
      %40 = dma.done [#allocation7], 2560
    $region21: #{tpu_custom_call.1} parent=1 // pred_fallthru
      _
    %v41 = vld [vmem:[#allocation3] sm:$0xff]
    %v42 = vld [vmem:[#allocation3 + $0x8] sm:$0xff]
    %v43 = vld [vmem:[#allocation3 + $0x10] sm:$0xff]
    %v44 = vld [vmem:[#allocation3 + $0x18] sm:$0xff]
    %46 = vrot.lane.b32.xlu0 %v41, 112
    %v47 = vpop.permute.xlu0 %46
    %49 = vrot.lane.b32.xlu0 %v41, 96
    %v50 = vpop.permute.xlu0 %49
    %52 = vrot.lane.b32.xlu0 %v41, 80
    %v53 = vpop.permute.xlu0 %52
    %55 = vrot.lane.b32.xlu0 %v41, 64
    %v56 = vpop.permute.xlu0 %55
    %58 = vrot.lane.b32.xlu0 %v41, 48
    %v59 = vpop.permute.xlu0 %58
    %61 = vrot.lane.b32.xlu0 %v41, 32
    %v62 = vpop.permute.xlu0 %61
    %64 = vrot.lane.b32.xlu0 %v41, 16
    %v65 = vpop.permute.xlu0 %64
    %68 = vrot.lane.b32.xlu0 %v42, 112
    %v69 = vpop.permute.xlu0 %68
    %71 = vrot.lane.b32.xlu0 %v42, 96
    %v72 = vpop.permute.xlu0 %71
    %74 = vrot.lane.b32.xlu0 %v42, 80
    %v75 = vpop.permute.xlu0 %74
    %77 = vrot.lane.b32.xlu0 %v42, 64
    %v78 = vpop.permute.xlu0 %77
    %80 = vrot.lane.b32.xlu0 %v42, 48
    %v81 = vpop.permute.xlu0 %80
    %83 = vrot.lane.b32.xlu0 %v42, 32
    %v84 = vpop.permute.xlu0 %83
    %86 = vrot.lane.b32.xlu0 %v42, 16
    %v87 = vpop.permute.xlu0 %86
    %90 = vrot.lane.b32.xlu0 %v43, 112
    %v91 = vpop.permute.xlu0 %90
    %93 = vrot.lane.b32.xlu0 %v43, 96
    %v94 = vpop.permute.xlu0 %93
    %96 = vrot.lane.b32.xlu0 %v43, 80
    %v97 = vpop.permute.xlu0 %96
    %99 = vrot.lane.b32.xlu0 %v43, 64
    %v100 = vpop.permute.xlu0 %99
    %102 = vrot.lane.b32.xlu0 %v43, 48
    %v103 = vpop.permute.xlu0 %102
    %105 = vrot.lane.b32.xlu0 %v43, 32
    %v106 = vpop.permute.xlu0 %105
    %108 = vrot.lane.b32.xlu0 %v43, 16
    %v109 = vpop.permute.xlu0 %108
    %112 = vrot.lane.b32.xlu0 %v44, 112
    %v113 = vpop.permute.xlu0 %112
    %115 = vrot.lane.b32.xlu0 %v44, 96
    %v116 = vpop.permute.xlu0 %115
    %118 = vrot.lane.b32.xlu0 %v44, 80
    %v119 = vpop.permute.xlu0 %118
    %121 = vrot.lane.b32.xlu0 %v44, 64
    %v122 = vpop.permute.xlu0 %121
    %124 = vrot.lane.b32.xlu0 %v44, 48
    %v125 = vpop.permute.xlu0 %124
    %127 = vrot.lane.b32.xlu0 %v44, 32
    %v128 = vpop.permute.xlu0 %127
    %130 = vrot.lane.b32.xlu0 %v44, 16
    %v131 = vpop.permute.xlu0 %130
    %v133 = vcombine.low %v41, %v50
    %v134 = vcombine.high %v41, %v50
    %v136 = vunpack.c.l.s4 1983009808
    %v137 = vunpack.c.0.s8 %v136
    %v138 = vlaneseq
    %v139 = vshrl.u32 %v138, 7
    %v140 = vsub.s32 %v137, %v139
    %v141 = vrot.slane %v133, %v140
    %v143 = vunpack.c.l.s4 1983009808
    %v144 = vunpack.c.0.s8 %v143
    %v145 = vlaneseq
    %v146 = vshrl.u32 %v145, 7
    %v147 = vsub.s32 %v144, %v146
    %v148 = vrot.slane %v134, %v147
    %v149 = vcombine.low %v47, %v53
    %v150 = vcombine.high %v47, %v53
    %v152 = vunpack.c.l.s4 1983009808
    %v153 = vunpack.c.0.s8 %v152
    %v154 = vlaneseq
    %v155 = vshrl.u32 %v154, 7
    %v156 = vsub.s32 %v153, %v155
    %v157 = vrot.slane %v149, %v156
    %v159 = vunpack.c.l.s4 1983009808
    %v160 = vunpack.c.0.s8 %v159
    %v161 = vlaneseq
    %v162 = vshrl.u32 %v161, 7
    %v163 = vsub.s32 %v160, %v162
    %v164 = vrot.slane %v150, %v163
    %v165 = vcombine.low %v56, %v62
    %v166 = vcombine.high %v56, %v62
    %v168 = vunpack.c.l.s4 1983009808
    %v169 = vunpack.c.0.s8 %v168
    %v170 = vlaneseq
    %v171 = vshrl.u32 %v170, 7
    %v172 = vsub.s32 %v169, %v171
    %v173 = vrot.slane %v165, %v172
    %v175 = vunpack.c.l.s4 1983009808
    %v176 = vunpack.c.0.s8 %v175
    %v177 = vlaneseq
    %v178 = vshrl.u32 %v177, 7
    %v179 = vsub.s32 %v176, %v178
    %v180 = vrot.slane %v166, %v179
    %v181 = vcombine.low %v59, %v65
    %v182 = vcombine.high %v59, %v65
    %v184 = vunpack.c.l.s4 1983009808
    %v185 = vunpack.c.0.s8 %v184
    %v186 = vlaneseq
    %v187 = vshrl.u32 %v186, 7
    %v188 = vsub.s32 %v185, %v187
    %v189 = vrot.slane %v181, %v188
    %v191 = vunpack.c.l.s4 1983009808
    %v192 = vunpack.c.0.s8 %v191
    %v193 = vlaneseq
    %v194 = vshrl.u32 %v193, 7
    %v195 = vsub.s32 %v192, %v194
    %v196 = vrot.slane %v182, %v195
    %v197 = vcombine.low %v141, %v157
    %v198 = vcombine.high %v141, %v157
    %v200 = vunpack.c.l.s4 1934713408
    %v201 = vunpack.c.0.s8 %v200
    %v202 = vlaneseq
    %v203 = vshrl.u32 %v202, 7
    %v204 = vsub.s32 %v201, %v203
    %v205 = vrot.slane %v197, %v204
    %v207 = vunpack.c.l.s4 1934713408
    %v208 = vunpack.c.0.s8 %v207
    %v209 = vlaneseq
    %v210 = vshrl.u32 %v209, 7
    %v211 = vsub.s32 %v208, %v210
    %v212 = vrot.slane %v198, %v211
    %v213 = vcombine.low %v148, %v164
    %v214 = vcombine.high %v148, %v164
    %v216 = vunpack.c.l.s4 1934713408
    %v217 = vunpack.c.0.s8 %v216
    %v218 = vlaneseq
    %v219 = vshrl.u32 %v218, 7
    %v220 = vsub.s32 %v217, %v219
    %v221 = vrot.slane %v213, %v220
    %v223 = vunpack.c.l.s4 1934713408
    %v224 = vunpack.c.0.s8 %v223
    %v225 = vlaneseq
    %v226 = vshrl.u32 %v225, 7
    %v227 = vsub.s32 %v224, %v226
    %v228 = vrot.slane %v214, %v227
    %v229 = vcombine.low %v173, %v189
    %v230 = vcombine.high %v173, %v189
    %v232 = vunpack.c.l.s4 1934713408
    %v233 = vunpack.c.0.s8 %v232
    %v234 = vlaneseq
    %v235 = vshrl.u32 %v234, 7
    %v236 = vsub.s32 %v233, %v235
    %v237 = vrot.slane %v229, %v236
    %v239 = vunpack.c.l.s4 1934713408
    %v240 = vunpack.c.0.s8 %v239
    %v241 = vlaneseq
    %v242 = vshrl.u32 %v241, 7
    %v243 = vsub.s32 %v240, %v242
    %v244 = vrot.slane %v230, %v243
    %v245 = vcombine.low %v180, %v196
    %v246 = vcombine.high %v180, %v196
    %v248 = vunpack.c.l.s4 1934713408
    %v249 = vunpack.c.0.s8 %v248
    %v250 = vlaneseq
    %v251 = vshrl.u32 %v250, 7
    %v252 = vsub.s32 %v249, %v251
    %v253 = vrot.slane %v245, %v252
    %v255 = vunpack.c.l.s4 1934713408
    %v256 = vunpack.c.0.s8 %v255
    %v257 = vlaneseq
    %v258 = vshrl.u32 %v257, 7
    %v259 = vsub.s32 %v256, %v258
    %v260 = vrot.slane %v246, %v259
    %v261 = vcombine.low %v205, %v237
    %v262 = vcombine.high %v205, %v237
    %v263 = vcombine.low %v212, %v244
    %v264 = vcombine.high %v212, %v244
    %v265 = vcombine.low %v221, %v253
    %v266 = vcombine.high %v221, %v253
    %v267 = vcombine.low %v228, %v260
    %v268 = vcombine.high %v228, %v260
    %v269 = vcombine.low %v42, %v72
    %v270 = vcombine.high %v42, %v72
    %v272 = vunpack.c.l.s4 1983009808
    %v273 = vunpack.c.0.s8 %v272
    %v274 = vlaneseq
    %v275 = vshrl.u32 %v274, 7
    %v276 = vsub.s32 %v273, %v275
    %v277 = vrot.slane %v269, %v276
    %v279 = vunpack.c.l.s4 1983009808
    %v280 = vunpack.c.0.s8 %v279
    %v281 = vlaneseq
    %v282 = vshrl.u32 %v281, 7
    %v283 = vsub.s32 %v280, %v282
    %v284 = vrot.slane %v270, %v283
    %v285 = vcombine.low %v69, %v75
    %v286 = vcombine.high %v69, %v75
    %v288 = vunpack.c.l.s4 1983009808
    %v289 = vunpack.c.0.s8 %v288
    %v290 = vlaneseq
    %v291 = vshrl.u32 %v290, 7
    %v292 = vsub.s32 %v289, %v291
    %v293 = vrot.slane %v285, %v292
    %v295 = vunpack.c.l.s4 1983009808
    %v296 = vunpack.c.0.s8 %v295
    %v297 = vlaneseq
    %v298 = vshrl.u32 %v297, 7
    %v299 = vsub.s32 %v296, %v298
    %v300 = vrot.slane %v286, %v299
    %v301 = vcombine.low %v78, %v84
    %v302 = vcombine.high %v78, %v84
    %v304 = vunpack.c.l.s4 1983009808
    %v305 = vunpack.c.0.s8 %v304
    %v306 = vlaneseq
    %v307 = vshrl.u32 %v306, 7
    %v308 = vsub.s32 %v305, %v307
    %v309 = vrot.slane %v301, %v308
    %v311 = vunpack.c.l.s4 1983009808
    %v312 = vunpack.c.0.s8 %v311
    %v313 = vlaneseq
    %v314 = vshrl.u32 %v313, 7
    %v315 = vsub.s32 %v312, %v314
    %v316 = vrot.slane %v302, %v315
    %v317 = vcombine.low %v81, %v87
    %v318 = vcombine.high %v81, %v87
    %v320 = vunpack.c.l.s4 1983009808
    %v321 = vunpack.c.0.s8 %v320
    %v322 = vlaneseq
    %v323 = vshrl.u32 %v322, 7
    %v324 = vsub.s32 %v321, %v323
    %v325 = vrot.slane %v317, %v324
    %v327 = vunpack.c.l.s4 1983009808
    %v328 = vunpack.c.0.s8 %v327
    %v329 = vlaneseq
    %v330 = vshrl.u32 %v329, 7
    %v331 = vsub.s32 %v328, %v330
    %v332 = vrot.slane %v318, %v331
    %v333 = vcombine.low %v277, %v293
    %v334 = vcombine.high %v277, %v293
    %v336 = vunpack.c.l.s4 1934713408
    %v337 = vunpack.c.0.s8 %v336
    %v338 = vlaneseq
    %v339 = vshrl.u32 %v338, 7
    %v340 = vsub.s32 %v337, %v339
    %v341 = vrot.slane %v333, %v340
    %v343 = vunpack.c.l.s4 1934713408
    %v344 = vunpack.c.0.s8 %v343
    %v345 = vlaneseq
    %v346 = vshrl.u32 %v345, 7
    %v347 = vsub.s32 %v344, %v346
    %v348 = vrot.slane %v334, %v347
    %v349 = vcombine.low %v284, %v300
    %v350 = vcombine.high %v284, %v300
    %v352 = vunpack.c.l.s4 1934713408
    %v353 = vunpack.c.0.s8 %v352
    %v354 = vlaneseq
    %v355 = vshrl.u32 %v354, 7
    %v356 = vsub.s32 %v353, %v355
    %v357 = vrot.slane %v349, %v356
    %v359 = vunpack.c.l.s4 1934713408
    %v360 = vunpack.c.0.s8 %v359
    %v361 = vlaneseq
    %v362 = vshrl.u32 %v361, 7
    %v363 = vsub.s32 %v360, %v362
    %v364 = vrot.slane %v350, %v363
    %v365 = vcombine.low %v309, %v325
    %v366 = vcombine.high %v309, %v325
    %v368 = vunpack.c.l.s4 1934713408
    %v369 = vunpack.c.0.s8 %v368
    %v370 = vlaneseq
    %v371 = vshrl.u32 %v370, 7
    %v372 = vsub.s32 %v369, %v371
    %v373 = vrot.slane %v365, %v372
    %v375 = vunpack.c.l.s4 1934713408
    %v376 = vunpack.c.0.s8 %v375
    %v377 = vlaneseq
    %v378 = vshrl.u32 %v377, 7
    %v379 = vsub.s32 %v376, %v378
    %v380 = vrot.slane %v366, %v379
    %v381 = vcombine.low %v316, %v332
    %v382 = vcombine.high %v316, %v332
    %v384 = vunpack.c.l.s4 1934713408
    %v385 = vunpack.c.0.s8 %v384
    %v386 = vlaneseq
    %v387 = vshrl.u32 %v386, 7
    %v388 = vsub.s32 %v385, %v387
    %v389 = vrot.slane %v381, %v388
    %v391 = vunpack.c.l.s4 1934713408
    %v392 = vunpack.c.0.s8 %v391
    %v393 = vlaneseq
    %v394 = vshrl.u32 %v393, 7
    %v395 = vsub.s32 %v392, %v394
    %v396 = vrot.slane %v382, %v395
    %v397 = vcombine.low %v341, %v373
    %v398 = vcombine.high %v341, %v373
    %v399 = vcombine.low %v348, %v380
    %v400 = vcombine.high %v348, %v380
    %v401 = vcombine.low %v357, %v389
    %v402 = vcombine.high %v357, %v389
    %v403 = vcombine.low %v364, %v396
    %v404 = vcombine.high %v364, %v396
    %v405 = vcombine.low %v43, %v94
    %v406 = vcombine.high %v43, %v94
    %v408 = vunpack.c.l.s4 1983009808
    %v409 = vunpack.c.0.s8 %v408
    %v410 = vlaneseq
    %v411 = vshrl.u32 %v410, 7
    %v412 = vsub.s32 %v409, %v411
    %v413 = vrot.slane %v405, %v412
    %v415 = vunpack.c.l.s4 1983009808
    %v416 = vunpack.c.0.s8 %v415
    %v417 = vlaneseq
    %v418 = vshrl.u32 %v417, 7
    %v419 = vsub.s32 %v416, %v418
    %v420 = vrot.slane %v406, %v419
    %v421 = vcombine.low %v91, %v97
    %v422 = vcombine.high %v91, %v97
    %v424 = vunpack.c.l.s4 1983009808
    %v425 = vunpack.c.0.s8 %v424
    %v426 = vlaneseq
    %v427 = vshrl.u32 %v426, 7
    %v428 = vsub.s32 %v425, %v427
    %v429 = vrot.slane %v421, %v428
    %v431 = vunpack.c.l.s4 1983009808
    %v432 = vunpack.c.0.s8 %v431
    %v433 = vlaneseq
    %v434 = vshrl.u32 %v433, 7
    %v435 = vsub.s32 %v432, %v434
    %v436 = vrot.slane %v422, %v435
    %v437 = vcombine.low %v100, %v106
    %v438 = vcombine.high %v100, %v106
    %v440 = vunpack.c.l.s4 1983009808
    %v441 = vunpack.c.0.s8 %v440
    %v442 = vlaneseq
    %v443 = vshrl.u32 %v442, 7
    %v444 = vsub.s32 %v441, %v443
    %v445 = vrot.slane %v437, %v444
    %v447 = vunpack.c.l.s4 1983009808
    %v448 = vunpack.c.0.s8 %v447
    %v449 = vlaneseq
    %v450 = vshrl.u32 %v449, 7
    %v451 = vsub.s32 %v448, %v450
    %v452 = vrot.slane %v438, %v451
    %v453 = vcombine.low %v103, %v109
    %v454 = vcombine.high %v103, %v109
    %v456 = vunpack.c.l.s4 1983009808
    %v457 = vunpack.c.0.s8 %v456
    %v458 = vlaneseq
    %v459 = vshrl.u32 %v458, 7
    %v460 = vsub.s32 %v457, %v459
    %v461 = vrot.slane %v453, %v460
    %v463 = vunpack.c.l.s4 1983009808
    %v464 = vunpack.c.0.s8 %v463
    %v465 = vlaneseq
    %v466 = vshrl.u32 %v465, 7
    %v467 = vsub.s32 %v464, %v466
    %v468 = vrot.slane %v454, %v467
    %v469 = vcombine.low %v413, %v429
    %v470 = vcombine.high %v413, %v429
    %v472 = vunpack.c.l.s4 1934713408
    %v473 = vunpack.c.0.s8 %v472
    %v474 = vlaneseq
    %v475 = vshrl.u32 %v474, 7
    %v476 = vsub.s32 %v473, %v475
    %v477 = vrot.slane %v469, %v476
    %v479 = vunpack.c.l.s4 1934713408
    %v480 = vunpack.c.0.s8 %v479
    %v481 = vlaneseq
    %v482 = vshrl.u32 %v481, 7
    %v483 = vsub.s32 %v480, %v482
    %v484 = vrot.slane %v470, %v483
    %v485 = vcombine.low %v420, %v436
    %v486 = vcombine.high %v420, %v436
    %v488 = vunpack.c.l.s4 1934713408
    %v489 = vunpack.c.0.s8 %v488
    %v490 = vlaneseq
    %v491 = vshrl.u32 %v490, 7
    %v492 = vsub.s32 %v489, %v491
    %v493 = vrot.slane %v485, %v492
    %v495 = vunpack.c.l.s4 1934713408
    %v496 = vunpack.c.0.s8 %v495
    %v497 = vlaneseq
    %v498 = vshrl.u32 %v497, 7
    %v499 = vsub.s32 %v496, %v498
    %v500 = vrot.slane %v486, %v499
    %v501 = vcombine.low %v445, %v461
    %v502 = vcombine.high %v445, %v461
    %v504 = vunpack.c.l.s4 1934713408
    %v505 = vunpack.c.0.s8 %v504
    %v506 = vlaneseq
    %v507 = vshrl.u32 %v506, 7
    %v508 = vsub.s32 %v505, %v507
    %v509 = vrot.slane %v501, %v508
    %v511 = vunpack.c.l.s4 1934713408
    %v512 = vunpack.c.0.s8 %v511
    %v513 = vlaneseq
    %v514 = vshrl.u32 %v513, 7
    %v515 = vsub.s32 %v512, %v514
    %v516 = vrot.slane %v502, %v515
    %v517 = vcombine.low %v452, %v468
    %v518 = vcombine.high %v452, %v468
    %v520 = vunpack.c.l.s4 1934713408
    %v521 = vunpack.c.0.s8 %v520
    %v522 = vlaneseq
    %v523 = vshrl.u32 %v522, 7
    %v524 = vsub.s32 %v521, %v523
    %v525 = vrot.slane %v517, %v524
    %v527 = vunpack.c.l.s4 1934713408
    %v528 = vunpack.c.0.s8 %v527
    %v529 = vlaneseq
    %v530 = vshrl.u32 %v529, 7
    %v531 = vsub.s32 %v528, %v530
    %v532 = vrot.slane %v518, %v531
    %v533 = vcombine.low %v477, %v509
    %v534 = vcombine.high %v477, %v509
    %v535 = vcombine.low %v484, %v516
    %v536 = vcombine.high %v484, %v516
    %v537 = vcombine.low %v493, %v525
    %v538 = vcombine.high %v493, %v525
    %v539 = vcombine.low %v500, %v532
    %v540 = vcombine.high %v500, %v532
    %v541 = vcombine.low %v44, %v116
    %v542 = vcombine.high %v44, %v116
    %v544 = vunpack.c.l.s4 1983009808
    %v545 = vunpack.c.0.s8 %v544
    %v546 = vlaneseq
    %v547 = vshrl.u32 %v546, 7
    %v548 = vsub.s32 %v545, %v547
    %v549 = vrot.slane %v541, %v548
    %v551 = vunpack.c.l.s4 1983009808
    %v552 = vunpack.c.0.s8 %v551
    %v553 = vlaneseq
    %v554 = vshrl.u32 %v553, 7
    %v555 = vsub.s32 %v552, %v554
    %v556 = vrot.slane %v542, %v555
    %v557 = vcombine.low %v113, %v119
    %v558 = vcombine.high %v113, %v119
    %v560 = vunpack.c.l.s4 1983009808
    %v561 = vunpack.c.0.s8 %v560
    %v562 = vlaneseq
    %v563 = vshrl.u32 %v562, 7
    %v564 = vsub.s32 %v561, %v563
    %v565 = vrot.slane %v557, %v564
    %v567 = vunpack.c.l.s4 1983009808
    %v568 = vunpack.c.0.s8 %v567
    %v569 = vlaneseq
    %v570 = vshrl.u32 %v569, 7
    %v571 = vsub.s32 %v568, %v570
    %v572 = vrot.slane %v558, %v571
    %v573 = vcombine.low %v122, %v128
    %v574 = vcombine.high %v122, %v128
    %v576 = vunpack.c.l.s4 1983009808
    %v577 = vunpack.c.0.s8 %v576
    %v578 = vlaneseq
    %v579 = vshrl.u32 %v578, 7
    %v580 = vsub.s32 %v577, %v579
    %v581 = vrot.slane %v573, %v580
    %v583 = vunpack.c.l.s4 1983009808
    %v584 = vunpack.c.0.s8 %v583
    %v585 = vlaneseq
    %v586 = vshrl.u32 %v585, 7
    %v587 = vsub.s32 %v584, %v586
    %v588 = vrot.slane %v574, %v587
    %v589 = vcombine.low %v125, %v131
    %v590 = vcombine.high %v125, %v131
    %v592 = vunpack.c.l.s4 1983009808
    %v593 = vunpack.c.0.s8 %v592
    %v594 = vlaneseq
    %v595 = vshrl.u32 %v594, 7
    %v596 = vsub.s32 %v593, %v595
    %v597 = vrot.slane %v589, %v596
    %v599 = vunpack.c.l.s4 1983009808
    %v600 = vunpack.c.0.s8 %v599
    %v601 = vlaneseq
    %v602 = vshrl.u32 %v601, 7
    %v603 = vsub.s32 %v600, %v602
    %v604 = vrot.slane %v590, %v603
    %v605 = vcombine.low %v549, %v565
    %v606 = vcombine.high %v549, %v565
    %v608 = vunpack.c.l.s4 1934713408
    %v609 = vunpack.c.0.s8 %v608
    %v610 = vlaneseq
    %v611 = vshrl.u32 %v610, 7
    %v612 = vsub.s32 %v609, %v611
    %v613 = vrot.slane %v605, %v612
    %v615 = vunpack.c.l.s4 1934713408
    %v616 = vunpack.c.0.s8 %v615
    %v617 = vlaneseq
    %v618 = vshrl.u32 %v617, 7
    %v619 = vsub.s32 %v616, %v618
    %v620 = vrot.slane %v606, %v619
    %v621 = vcombine.low %v556, %v572
    %v622 = vcombine.high %v556, %v572
    %v624 = vunpack.c.l.s4 1934713408
    %v625 = vunpack.c.0.s8 %v624
    %v626 = vlaneseq
    %v627 = vshrl.u32 %v626, 7
    %v628 = vsub.s32 %v625, %v627
    %v629 = vrot.slane %v621, %v628
    %v631 = vunpack.c.l.s4 1934713408
    %v632 = vunpack.c.0.s8 %v631
    %v633 = vlaneseq
    %v634 = vshrl.u32 %v633, 7
    %v635 = vsub.s32 %v632, %v634
    %v636 = vrot.slane %v622, %v635
    %v637 = vcombine.low %v581, %v597
    %v638 = vcombine.high %v581, %v597
    %v640 = vunpack.c.l.s4 1934713408
    %v641 = vunpack.c.0.s8 %v640
    %v642 = vlaneseq
    %v643 = vshrl.u32 %v642, 7
    %v644 = vsub.s32 %v641, %v643
    %v645 = vrot.slane %v637, %v644
    %v647 = vunpack.c.l.s4 1934713408
    %v648 = vunpack.c.0.s8 %v647
    %v649 = vlaneseq
    %v650 = vshrl.u32 %v649, 7
    %v651 = vsub.s32 %v648, %v650
    %v652 = vrot.slane %v638, %v651
    %v653 = vcombine.low %v588, %v604
    %v654 = vcombine.high %v588, %v604
    %v656 = vunpack.c.l.s4 1934713408
    %v657 = vunpack.c.0.s8 %v656
    %v658 = vlaneseq
    %v659 = vshrl.u32 %v658, 7
    %v660 = vsub.s32 %v657, %v659
    %v661 = vrot.slane %v653, %v660
    %v663 = vunpack.c.l.s4 1934713408
    %v664 = vunpack.c.0.s8 %v663
    %v665 = vlaneseq
    %v666 = vshrl.u32 %v665, 7
    %v667 = vsub.s32 %v664, %v666
    %v668 = vrot.slane %v654, %v667
    %v669 = vcombine.low %v613, %v645
    %v670 = vcombine.high %v613, %v645
    %v671 = vcombine.low %v620, %v652
    %v672 = vcombine.high %v620, %v652
    %v673 = vcombine.low %v629, %v661
    %v674 = vcombine.high %v629, %v661
    %v675 = vcombine.low %v636, %v668
    %v676 = vcombine.high %v636, %v668
    %677 = vxpose.xlu0.b32.start [1/16] %v261, 128
    %678 = vxpose.xlu0.b32.cont [2/16] %v397, 128
    %679 = vxpose.xlu0.b32.cont [3/16] %v533, 128
    %680 = vxpose.xlu0.b32.cont [4/16] %v669, 128
    %681 = vxpose.xlu0.b32.cont [5/16] 0.0, 128
    %682 = vxpose.xlu0.b32.cont [6/16] 0.0, 128
    %683 = vxpose.xlu0.b32.cont [7/16] 0.0, 128
    %684 = vxpose.xlu0.b32.cont [8/16] 0.0, 128
    %685 = vxpose.xlu0.b32.cont [9/16] 0.0, 128
    %686 = vxpose.xlu0.b32.cont [10/16] 0.0, 128
    %687 = vxpose.xlu0.b32.cont [11/16] 0.0, 128
    %688 = vxpose.xlu0.b32.cont [12/16] 0.0, 128
    %689 = vxpose.xlu0.b32.cont [13/16] 0.0, 128
    %690 = vxpose.xlu0.b32.cont [14/16] 0.0, 128
    %691 = vxpose.xlu0.b32.cont [15/16] 0.0, 128
    %692 = vxpose.xlu0.b32.end [16/16] 0.0, 128
    %v693 = vpop.trf.xlu0
    %v694 = vpop.trf.xlu0
    %v695 = vpop.trf.xlu0
    %v696 = vpop.trf.xlu0
    %v697 = vpop.trf.xlu0
    %v698 = vpop.trf.xlu0
    %v699 = vpop.trf.xlu0
    %v700 = vpop.trf.xlu0
    %v701 = vpop.trf.xlu0
    %v702 = vpop.trf.xlu0
    %v703 = vpop.trf.xlu0
    %v704 = vpop.trf.xlu0
    %v705 = vpop.trf.xlu0
    %v706 = vpop.trf.xlu0
    %v707 = vpop.trf.xlu0
    %v708 = vpop.trf.xlu0
    %709 = vxpose.xlu0.b32.start [1/16] %v262, 128
    %710 = vxpose.xlu0.b32.cont [2/16] %v398, 128
    %711 = vxpose.xlu0.b32.cont [3/16] %v534, 128
    %712 = vxpose.xlu0.b32.cont [4/16] %v670, 128
    %713 = vxpose.xlu0.b32.cont [5/16] 0.0, 128
    %714 = vxpose.xlu0.b32.cont [6/16] 0.0, 128
    %715 = vxpose.xlu0.b32.cont [7/16] 0.0, 128
    %716 = vxpose.xlu0.b32.cont [8/16] 0.0, 128
    %717 = vxpose.xlu0.b32.cont [9/16] 0.0, 128
    %718 = vxpose.xlu0.b32.cont [10/16] 0.0, 128
    %719 = vxpose.xlu0.b32.cont [11/16] 0.0, 128
    %720 = vxpose.xlu0.b32.cont [12/16] 0.0, 128
    %721 = vxpose.xlu0.b32.cont [13/16] 0.0, 128
    %722 = vxpose.xlu0.b32.cont [14/16] 0.0, 128
    %723 = vxpose.xlu0.b32.cont [15/16] 0.0, 128
    %724 = vxpose.xlu0.b32.end [16/16] 0.0, 128
    %v725 = vpop.trf.xlu0
    %v726 = vpop.trf.xlu0
    %v727 = vpop.trf.xlu0
    %v728 = vpop.trf.xlu0
    %v729 = vpop.trf.xlu0
    %v730 = vpop.trf.xlu0
    %v731 = vpop.trf.xlu0
    %v732 = vpop.trf.xlu0
    %v733 = vpop.trf.xlu0
    %v734 = vpop.trf.xlu0
    %v735 = vpop.trf.xlu0
    %v736 = vpop.trf.xlu0
    %v737 = vpop.trf.xlu0
    %v738 = vpop.trf.xlu0
    %v739 = vpop.trf.xlu0
    %v740 = vpop.trf.xlu0
    %741 = vxpose.xlu0.b32.start [1/16] %v263, 128
    %742 = vxpose.xlu0.b32.cont [2/16] %v399, 128
    %743 = vxpose.xlu0.b32.cont [3/16] %v535, 128
    %744 = vxpose.xlu0.b32.cont [4/16] %v671, 128
    %745 = vxpose.xlu0.b32.cont [5/16] 0.0, 128
    %746 = vxpose.xlu0.b32.cont [6/16] 0.0, 128
    %747 = vxpose.xlu0.b32.cont [7/16] 0.0, 128
    %748 = vxpose.xlu0.b32.cont [8/16] 0.0, 128
    %749 = vxpose.xlu0.b32.cont [9/16] 0.0, 128
    %750 = vxpose.xlu0.b32.cont [10/16] 0.0, 128
    %751 = vxpose.xlu0.b32.cont [11/16] 0.0, 128
    %752 = vxpose.xlu0.b32.cont [12/16] 0.0, 128
    %753 = vxpose.xlu0.b32.cont [13/16] 0.0, 128
    %754 = vxpose.xlu0.b32.cont [14/16] 0.0, 128
    %755 = vxpose.xlu0.b32.cont [15/16] 0.0, 128
    %756 = vxpose.xlu0.b32.end [16/16] 0.0, 128
    %v757 = vpop.trf.xlu0
    %v758 = vpop.trf.xlu0
    %v759 = vpop.trf.xlu0
    %v760 = vpop.trf.xlu0
    %v761 = vpop.trf.xlu0
    %v762 = vpop.trf.xlu0
    %v763 = vpop.trf.xlu0
    %v764 = vpop.trf.xlu0
    %v765 = vpop.trf.xlu0
    %v766 = vpop.trf.xlu0
    %v767 = vpop.trf.xlu0
    %v768 = vpop.trf.xlu0
    %v769 = vpop.trf.xlu0
    %v770 = vpop.trf.xlu0
    %v771 = vpop.trf.xlu0
    %v772 = vpop.trf.xlu0
    %773 = vxpose.xlu0.b32.start [1/16] %v264, 128
    %774 = vxpose.xlu0.b32.cont [2/16] %v400, 128
    %775 = vxpose.xlu0.b32.cont [3/16] %v536, 128
    %776 = vxpose.xlu0.b32.cont [4/16] %v672, 128
    %777 = vxpose.xlu0.b32.cont [5/16] 0.0, 128
    %778 = vxpose.xlu0.b32.cont [6/16] 0.0, 128
    %779 = vxpose.xlu0.b32.cont [7/16] 0.0, 128
    %780 = vxpose.xlu0.b32.cont [8/16] 0.0, 128
    %781 = vxpose.xlu0.b32.cont [9/16] 0.0, 128
    %782 = vxpose.xlu0.b32.cont [10/16] 0.0, 128
    %783 = vxpose.xlu0.b32.cont [11/16] 0.0, 128
    %784 = vxpose.xlu0.b32.cont [12/16] 0.0, 128
    %785 = vxpose.xlu0.b32.cont [13/16] 0.0, 128
    %786 = vxpose.xlu0.b32.cont [14/16] 0.0, 128
    %787 = vxpose.xlu0.b32.cont [15/16] 0.0, 128
    %788 = vxpose.xlu0.b32.end [16/16] 0.0, 128
    %v789 = vpop.trf.xlu0
    %v790 = vpop.trf.xlu0
    %v791 = vpop.trf.xlu0
    %v792 = vpop.trf.xlu0
    %v793 = vpop.trf.xlu0
    %v794 = vpop.trf.xlu0
    %v795 = vpop.trf.xlu0
    %v796 = vpop.trf.xlu0
    %v797 = vpop.trf.xlu0
    %v798 = vpop.trf.xlu0
    %v799 = vpop.trf.xlu0
    %v800 = vpop.trf.xlu0
    %v801 = vpop.trf.xlu0
    %v802 = vpop.trf.xlu0
    %v803 = vpop.trf.xlu0
    %v804 = vpop.trf.xlu0
    %805 = vxpose.xlu0.b32.start [1/16] %v265, 128
    %806 = vxpose.xlu0.b32.cont [2/16] %v401, 128
    %807 = vxpose.xlu0.b32.cont [3/16] %v537, 128
    %808 = vxpose.xlu0.b32.cont [4/16] %v673, 128
    %809 = vxpose.xlu0.b32.cont [5/16] 0.0, 128
    %810 = vxpose.xlu0.b32.cont [6/16] 0.0, 128
    %811 = vxpose.xlu0.b32.cont [7/16] 0.0, 128
    %812 = vxpose.xlu0.b32.cont [8/16] 0.0, 128
    %813 = vxpose.xlu0.b32.cont [9/16] 0.0, 128
    %814 = vxpose.xlu0.b32.cont [10/16] 0.0, 128
    %815 = vxpose.xlu0.b32.cont [11/16] 0.0, 128
    %816 = vxpose.xlu0.b32.cont [12/16] 0.0, 128
    %817 = vxpose.xlu0.b32.cont [13/16] 0.0, 128
    %818 = vxpose.xlu0.b32.cont [14/16] 0.0, 128
    %819 = vxpose.xlu0.b32.cont [15/16] 0.0, 128
    %820 = vxpose.xlu0.b32.end [16/16] 0.0, 128
    %v821 = vpop.trf.xlu0
    %v822 = vpop.trf.xlu0
    %v823 = vpop.trf.xlu0
    %v824 = vpop.trf.xlu0
    %v825 = vpop.trf.xlu0
    %v826 = vpop.trf.xlu0
    %v827 = vpop.trf.xlu0
    %v828 = vpop.trf.xlu0
    %v829 = vpop.trf.xlu0
    %v830 = vpop.trf.xlu0
    %v831 = vpop.trf.xlu0
    %v832 = vpop.trf.xlu0
    %v833 = vpop.trf.xlu0
    %v834 = vpop.trf.xlu0
    %v835 = vpop.trf.xlu0
    %v836 = vpop.trf.xlu0
    %837 = vxpose.xlu0.b32.start [1/16] %v266, 128
    %838 = vxpose.xlu0.b32.cont [2/16] %v402, 128
    %839 = vxpose.xlu0.b32.cont [3/16] %v538, 128
    %840 = vxpose.xlu0.b32.cont [4/16] %v674, 128
    %841 = vxpose.xlu0.b32.cont [5/16] 0.0, 128
    %842 = vxpose.xlu0.b32.cont [6/16] 0.0, 128
    %843 = vxpose.xlu0.b32.cont [7/16] 0.0, 128
    %844 = vxpose.xlu0.b32.cont [8/16] 0.0, 128
    %845 = vxpose.xlu0.b32.cont [9/16] 0.0, 128
    %846 = vxpose.xlu0.b32.cont [10/16] 0.0, 128
    %847 = vxpose.xlu0.b32.cont [11/16] 0.0, 128
    %848 = vxpose.xlu0.b32.cont [12/16] 0.0, 128
    %849 = vxpose.xlu0.b32.cont [13/16] 0.0, 128
    %850 = vxpose.xlu0.b32.cont [14/16] 0.0, 128
    %851 = vxpose.xlu0.b32.cont [15/16] 0.0, 128
    %852 = vxpose.xlu0.b32.end [16/16] 0.0, 128
    %v853 = vpop.trf.xlu0
    %v854 = vpop.trf.xlu0
    %v855 = vpop.trf.xlu0
    %v856 = vpop.trf.xlu0
    %v857 = vpop.trf.xlu0
    %v858 = vpop.trf.xlu0
    %v859 = vpop.trf.xlu0
    %v860 = vpop.trf.xlu0
    %v861 = vpop.trf.xlu0
    %v862 = vpop.trf.xlu0
    %v863 = vpop.trf.xlu0
    %v864 = vpop.trf.xlu0
    %v865 = vpop.trf.xlu0
    %v866 = vpop.trf.xlu0
    %v867 = vpop.trf.xlu0
    %v868 = vpop.trf.xlu0
    %869 = vxpose.xlu0.b32.start [1/16] %v267, 128
    %870 = vxpose.xlu0.b32.cont [2/16] %v403, 128
    %871 = vxpose.xlu0.b32.cont [3/16] %v539, 128
    %872 = vxpose.xlu0.b32.cont [4/16] %v675, 128
    %873 = vxpose.xlu0.b32.cont [5/16] 0.0, 128
    %874 = vxpose.xlu0.b32.cont [6/16] 0.0, 128
    %875 = vxpose.xlu0.b32.cont [7/16] 0.0, 128
    %876 = vxpose.xlu0.b32.cont [8/16] 0.0, 128
    %877 = vxpose.xlu0.b32.cont [9/16] 0.0, 128
    %878 = vxpose.xlu0.b32.cont [10/16] 0.0, 128
    %879 = vxpose.xlu0.b32.cont [11/16] 0.0, 128
    %880 = vxpose.xlu0.b32.cont [12/16] 0.0, 128
    %881 = vxpose.xlu0.b32.cont [13/16] 0.0, 128
    %882 = vxpose.xlu0.b32.cont [14/16] 0.0, 128
    %883 = vxpose.xlu0.b32.cont [15/16] 0.0, 128
    %884 = vxpose.xlu0.b32.end [16/16] 0.0, 128
    %v885 = vpop.trf.xlu0
    %v886 = vpop.trf.xlu0
    %v887 = vpop.trf.xlu0
    %v888 = vpop.trf.xlu0
    %v889 = vpop.trf.xlu0
    %v890 = vpop.trf.xlu0
    %v891 = vpop.trf.xlu0
    %v892 = vpop.trf.xlu0
    %v893 = vpop.trf.xlu0
    %v894 = vpop.trf.xlu0
    %v895 = vpop.trf.xlu0
    %v896 = vpop.trf.xlu0
    %v897 = vpop.trf.xlu0
    %v898 = vpop.trf.xlu0
    %v899 = vpop.trf.xlu0
    %v900 = vpop.trf.xlu0
    %901 = vxpose.xlu0.b32.start [1/16] %v268, 128
    %902 = vxpose.xlu0.b32.cont [2/16] %v404, 128
    %903 = vxpose.xlu0.b32.cont [3/16] %v540, 128
    %904 = vxpose.xlu0.b32.cont [4/16] %v676, 128
    %905 = vxpose.xlu0.b32.cont [5/16] 0.0, 128
    %906 = vxpose.xlu0.b32.cont [6/16] 0.0, 128
    %907 = vxpose.xlu0.b32.cont [7/16] 0.0, 128
    %908 = vxpose.xlu0.b32.cont [8/16] 0.0, 128
    %909 = vxpose.xlu0.b32.cont [9/16] 0.0, 128
    %910 = vxpose.xlu0.b32.cont [10/16] 0.0, 128
    %911 = vxpose.xlu0.b32.cont [11/16] 0.0, 128
    %912 = vxpose.xlu0.b32.cont [12/16] 0.0, 128
    %913 = vxpose.xlu0.b32.cont [13/16] 0.0, 128
    %914 = vxpose.xlu0.b32.cont [14/16] 0.0, 128
    %915 = vxpose.xlu0.b32.cont [15/16] 0.0, 128
    %916 = vxpose.xlu0.b32.end [16/16] 0.0, 128
    %v917 = vpop.trf.xlu0
    %v918 = vpop.trf.xlu0
    %v919 = vpop.trf.xlu0
    %v920 = vpop.trf.xlu0
    %v921 = vpop.trf.xlu0
    %v922 = vpop.trf.xlu0
    %v923 = vpop.trf.xlu0
    %v924 = vpop.trf.xlu0
    %v925 = vpop.trf.xlu0
    %v926 = vpop.trf.xlu0
    %v927 = vpop.trf.xlu0
    %v928 = vpop.trf.xlu0
    %v929 = vpop.trf.xlu0
    %v930 = vpop.trf.xlu0
    %v931 = vpop.trf.xlu0
    %v932 = vpop.trf.xlu0
    %vm933 = vcmask 261120
    %934 = vst.msk [vmem:[#allocation2] sm:$0xff] %vm933, %v693
    %vm935 = vcmask 257024
    %936 = vst.msk [vmem:[#allocation2 + $0x10] sm:$0xf] %vm935, %v694
    %937 = vst.msk [vmem:[#allocation2 + $0x20] sm:$0xff] %vm933, %v725
    %938 = vst.msk [vmem:[#allocation2 + $0x30] sm:$0xf] %vm935, %v726
    %939 = vst.msk [vmem:[#allocation2 + $0x40] sm:$0xff] %vm933, %v757
    %940 = vst.msk [vmem:[#allocation2 + $0x50] sm:$0xf] %vm935, %v758
    %941 = vst.msk [vmem:[#allocation2 + $0x60] sm:$0xff] %vm933, %v789
    %942 = vst.msk [vmem:[#allocation2 + $0x70] sm:$0xf] %vm935, %v790
    %943 = vst.msk [vmem:[#allocation2 + $0x80] sm:$0xff] %vm933, %v821
    %944 = vst.msk [vmem:[#allocation2 + $0x90] sm:$0xf] %vm935, %v822
    %945 = vst.msk [vmem:[#allocation2 + $0xa0] sm:$0xff] %vm933, %v853
    %946 = vst.msk [vmem:[#allocation2 + $0xb0] sm:$0xf] %vm935, %v854
    %947 = vst.msk [vmem:[#allocation2 + $0xc0] sm:$0xff] %vm933, %v885
    %948 = vst.msk [vmem:[#allocation2 + $0xd0] sm:$0xf] %vm935, %v886
    %949 = vst.msk [vmem:[#allocation2 + $0xe0] sm:$0xff] %vm933, %v917
    %950 = vst.msk [vmem:[#allocation2 + $0xf0] sm:$0xf] %vm935, %v918
    %vm967 = vcmask 1046528
    %v968 = vrot.slane %v693, 1
    %v969 = vrot.slane %v694, 1
    %v970 = vsel %vm967, %v968, %v969
    %v971 = vrot.slane %v725, 1
    %v972 = vrot.slane %v726, 1
    %v973 = vsel %vm967, %v971, %v972
    %v974 = vrot.slane %v757, 1
    %v975 = vrot.slane %v758, 1
    %v976 = vsel %vm967, %v974, %v975
    %v977 = vrot.slane %v789, 1
    %v978 = vrot.slane %v790, 1
    %v979 = vsel %vm967, %v977, %v978
    %v980 = vrot.slane %v821, 1
    %v981 = vrot.slane %v822, 1
    %v982 = vsel %vm967, %v980, %v981
    %v983 = vrot.slane %v853, 1
    %v984 = vrot.slane %v854, 1
    %v985 = vsel %vm967, %v983, %v984
    %v986 = vrot.slane %v885, 1
    %v987 = vrot.slane %v886, 1
    %v988 = vsel %vm967, %v986, %v987
    %v989 = vrot.slane %v917, 1
    %v990 = vrot.slane %v918, 1
    %v991 = vsel %vm967, %v989, %v990
    %992 = vrot.lane.b32.xlu0 %v970, 32
    %v993 = vpop.permute.xlu0 %992
    %994 = vrot.lane.b32.xlu0 %v969, 32
    %v995 = vpop.permute.xlu0 %994
    %996 = vrot.lane.b32.xlu0 %v973, 32
    %v997 = vpop.permute.xlu0 %996
    %998 = vrot.lane.b32.xlu0 %v972, 32
    %v999 = vpop.permute.xlu0 %998
    %1000 = vrot.lane.b32.xlu0 %v976, 32
    %v1001 = vpop.permute.xlu0 %1000
    %1002 = vrot.lane.b32.xlu0 %v975, 32
    %v1003 = vpop.permute.xlu0 %1002
    %1004 = vrot.lane.b32.xlu0 %v979, 32
    %v1005 = vpop.permute.xlu0 %1004
    %1006 = vrot.lane.b32.xlu0 %v978, 32
    %v1007 = vpop.permute.xlu0 %1006
    %1008 = vrot.lane.b32.xlu0 %v982, 32
    %v1009 = vpop.permute.xlu0 %1008
    %1010 = vrot.lane.b32.xlu0 %v981, 32
    %v1011 = vpop.permute.xlu0 %1010
    %1012 = vrot.lane.b32.xlu0 %v985, 32
    %v1013 = vpop.permute.xlu0 %1012
    %1014 = vrot.lane.b32.xlu0 %v984, 32
    %v1015 = vpop.permute.xlu0 %1014
    %1016 = vrot.lane.b32.xlu0 %v988, 32
    %v1017 = vpop.permute.xlu0 %1016
    %1018 = vrot.lane.b32.xlu0 %v987, 32
    %v1019 = vpop.permute.xlu0 %1018
    %1020 = vrot.lane.b32.xlu0 %v991, 32
    %v1021 = vpop.permute.xlu0 %1020
    %1022 = vrot.lane.b32.xlu0 %v990, 32
    %v1023 = vpop.permute.xlu0 %1022
    %vm1040 = vcmask 523520
    %1041 = vst.msk [vmem:[#allocation2] sm:$0xff] %vm1040, %v993
    %vm1042 = vcmask 519424
    %1043 = vst.msk [vmem:[#allocation2 + $0x10] sm:$0xf] %vm1042, %v995
    %1044 = vst.msk [vmem:[#allocation2 + $0x20] sm:$0xff] %vm1040, %v997
    %1045 = vst.msk [vmem:[#allocation2 + $0x30] sm:$0xf] %vm1042, %v999
    %1046 = vst.msk [vmem:[#allocation2 + $0x40] sm:$0xff] %vm1040, %v1001
    %1047 = vst.msk [vmem:[#allocation2 + $0x50] sm:$0xf] %vm1042, %v1003
    %1048 = vst.msk [vmem:[#allocation2 + $0x60] sm:$0xff] %vm1040, %v1005
    %1049 = vst.msk [vmem:[#allocation2 + $0x70] sm:$0xf] %vm1042, %v1007
    %1050 = vst.msk [vmem:[#allocation2 + $0x80] sm:$0xff] %vm1040, %v1009
    %1051 = vst.msk [vmem:[#allocation2 + $0x90] sm:$0xf] %vm1042, %v1011
    %1052 = vst.msk [vmem:[#allocation2 + $0xa0] sm:$0xff] %vm1040, %v1013
    %1053 = vst.msk [vmem:[#allocation2 + $0xb0] sm:$0xf] %vm1042, %v1015
    %1054 = vst.msk [vmem:[#allocation2 + $0xc0] sm:$0xff] %vm1040, %v1017
    %1055 = vst.msk [vmem:[#allocation2 + $0xd0] sm:$0xf] %vm1042, %v1019
    %1056 = vst.msk [vmem:[#allocation2 + $0xe0] sm:$0xff] %vm1040, %v1021
    %1057 = vst.msk [vmem:[#allocation2 + $0xf0] sm:$0xf] %vm1042, %v1023
    %vm1058 = vcmask 1045504
    %v1059 = vrot.slane %v693, 2
    %v1060 = vrot.slane %v694, 2
    %v1061 = vsel %vm1058, %v1059, %v1060
    %v1062 = vrot.slane %v725, 2
    %v1063 = vrot.slane %v726, 2
    %v1064 = vsel %vm1058, %v1062, %v1063
    %v1065 = vrot.slane %v757, 2
    %v1066 = vrot.slane %v758, 2
    %v1067 = vsel %vm1058, %v1065, %v1066
    %v1068 = vrot.slane %v789, 2
    %v1069 = vrot.slane %v790, 2
    %v1070 = vsel %vm1058, %v1068, %v1069
    %v1071 = vrot.slane %v821, 2
    %v1072 = vrot.slane %v822, 2
    %v1073 = vsel %vm1058, %v1071, %v1072
    %v1074 = vrot.slane %v853, 2
    %v1075 = vrot.slane %v854, 2
    %v1076 = vsel %vm1058, %v1074, %v1075
    %v1077 = vrot.slane %v885, 2
    %v1078 = vrot.slane %v886, 2
    %v1079 = vsel %vm1058, %v1077, %v1078
    %v1080 = vrot.slane %v917, 2
    %v1081 = vrot.slane %v918, 2
    %v1082 = vsel %vm1058, %v1080, %v1081
    %1083 = vrot.lane.b32.xlu0 %v1061, 64
    %v1084 = vpop.permute.xlu0 %1083
    %1085 = vrot.lane.b32.xlu0 %v1060, 64
    %v1086 = vpop.permute.xlu0 %1085
    %1087 = vrot.lane.b32.xlu0 %v1064, 64
    %v1088 = vpop.permute.xlu0 %1087
    %1089 = vrot.lane.b32.xlu0 %v1063, 64
    %v1090 = vpop.permute.xlu0 %1089
    %1091 = vrot.lane.b32.xlu0 %v1067, 64
    %v1092 = vpop.permute.xlu0 %1091
    %1093 = vrot.lane.b32.xlu0 %v1066, 64
    %v1094 = vpop.permute.xlu0 %1093
    %1095 = vrot.lane.b32.xlu0 %v1070, 64
    %v1096 = vpop.permute.xlu0 %1095
    %1097 = vrot.lane.b32.xlu0 %v1069, 64
    %v1098 = vpop.permute.xlu0 %1097
    %1099 = vrot.lane.b32.xlu0 %v1073, 64
    %v1100 = vpop.permute.xlu0 %1099
    %1101 = vrot.lane.b32.xlu0 %v1072, 64
    %v1102 = vpop.permute.xlu0 %1101
    %1103 = vrot.lane.b32.xlu0 %v1076, 64
    %v1104 = vpop.permute.xlu0 %1103
    %1105 = vrot.lane.b32.xlu0 %v1075, 64
    %v1106 = vpop.permute.xlu0 %1105
    %1107 = vrot.lane.b32.xlu0 %v1079, 64
    %v1108 = vpop.permute.xlu0 %1107
    %1109 = vrot.lane.b32.xlu0 %v1078, 64
    %v1110 = vpop.permute.xlu0 %1109
    %1111 = vrot.lane.b32.xlu0 %v1082, 64
    %v1112 = vpop.permute.xlu0 %1111
    %1113 = vrot.lane.b32.xlu0 %v1081, 64
    %v1114 = vpop.permute.xlu0 %1113
    %vm1131 = vcmask 785920
    %1132 = vst.msk [vmem:[#allocation2] sm:$0xff] %vm1131, %v1084
    %vm1133 = vcmask 781824
    %1134 = vst.msk [vmem:[#allocation2 + $0x10] sm:$0xf] %vm1133, %v1086
    %1135 = vst.msk [vmem:[#allocation2 + $0x20] sm:$0xff] %vm1131, %v1088
    %1136 = vst.msk [vmem:[#allocation2 + $0x30] sm:$0xf] %vm1133, %v1090
    %1137 = vst.msk [vmem:[#allocation2 + $0x40] sm:$0xff] %vm1131, %v1092
    %1138 = vst.msk [vmem:[#allocation2 + $0x50] sm:$0xf] %vm1133, %v1094
    %1139 = vst.msk [vmem:[#allocation2 + $0x60] sm:$0xff] %vm1131, %v1096
    %1140 = vst.msk [vmem:[#allocation2 + $0x70] sm:$0xf] %vm1133, %v1098
    %1141 = vst.msk [vmem:[#allocation2 + $0x80] sm:$0xff] %vm1131, %v1100
    %1142 = vst.msk [vmem:[#allocation2 + $0x90] sm:$0xf] %vm1133, %v1102
    %1143 = vst.msk [vmem:[#allocation2 + $0xa0] sm:$0xff] %vm1131, %v1104
    %1144 = vst.msk [vmem:[#allocation2 + $0xb0] sm:$0xf] %vm1133, %v1106
    %1145 = vst.msk [vmem:[#allocation2 + $0xc0] sm:$0xff] %vm1131, %v1108
    %1146 = vst.msk [vmem:[#allocation2 + $0xd0] sm:$0xf] %vm1133, %v1110
    %1147 = vst.msk [vmem:[#allocation2 + $0xe0] sm:$0xff] %vm1131, %v1112
    %1148 = vst.msk [vmem:[#allocation2 + $0xf0] sm:$0xf] %vm1133, %v1114
    %vm1149 = vcmask 1044480
    %v1150 = vrot.slane %v693, 3
    %v1151 = vrot.slane %v694, 3
    %v1152 = vsel %vm1149, %v1150, %v1151
    %v1153 = vrot.slane %v725, 3
    %v1154 = vrot.slane %v726, 3
    %v1155 = vsel %vm1149, %v1153, %v1154
    %v1156 = vrot.slane %v757, 3
    %v1157 = vrot.slane %v758, 3
    %v1158 = vsel %vm1149, %v1156, %v1157
    %v1159 = vrot.slane %v789, 3
    %v1160 = vrot.slane %v790, 3
    %v1161 = vsel %vm1149, %v1159, %v1160
    %v1162 = vrot.slane %v821, 3
    %v1163 = vrot.slane %v822, 3
    %v1164 = vsel %vm1149, %v1162, %v1163
    %v1165 = vrot.slane %v853, 3
    %v1166 = vrot.slane %v854, 3
    %v1167 = vsel %vm1149, %v1165, %v1166
    %v1168 = vrot.slane %v885, 3
    %v1169 = vrot.slane %v886, 3
    %v1170 = vsel %vm1149, %v1168, %v1169
    %v1171 = vrot.slane %v917, 3
    %v1172 = vrot.slane %v918, 3
    %v1173 = vsel %vm1149, %v1171, %v1172
    %1174 = vrot.lane.b32.xlu0 %v1152, 96
    %v1175 = vpop.permute.xlu0 %1174
    %1176 = vrot.lane.b32.xlu0 %v1151, 96
    %v1177 = vpop.permute.xlu0 %1176
    %1178 = vrot.lane.b32.xlu0 %v1155, 96
    %v1179 = vpop.permute.xlu0 %1178
    %1180 = vrot.lane.b32.xlu0 %v1154, 96
    %v1181 = vpop.permute.xlu0 %1180
    %1182 = vrot.lane.b32.xlu0 %v1158, 96
    %v1183 = vpop.permute.xlu0 %1182
    %1184 = vrot.lane.b32.xlu0 %v1157, 96
    %v1185 = vpop.permute.xlu0 %1184
    %1186 = vrot.lane.b32.xlu0 %v1161, 96
    %v1187 = vpop.permute.xlu0 %1186
    %1188 = vrot.lane.b32.xlu0 %v1160, 96
    %v1189 = vpop.permute.xlu0 %1188
    %1190 = vrot.lane.b32.xlu0 %v1164, 96
    %v1191 = vpop.permute.xlu0 %1190
    %1192 = vrot.lane.b32.xlu0 %v1163, 96
    %v1193 = vpop.permute.xlu0 %1192
    %1194 = vrot.lane.b32.xlu0 %v1167, 96
    %v1195 = vpop.permute.xlu0 %1194
    %1196 = vrot.lane.b32.xlu0 %v1166, 96
    %v1197 = vpop.permute.xlu0 %1196
    %1198 = vrot.lane.b32.xlu0 %v1170, 96
    %v1199 = vpop.permute.xlu0 %1198
    %1200 = vrot.lane.b32.xlu0 %v1169, 96
    %v1201 = vpop.permute.xlu0 %1200
    %1202 = vrot.lane.b32.xlu0 %v1173, 96
    %v1203 = vpop.permute.xlu0 %1202
    %1204 = vrot.lane.b32.xlu0 %v1172, 96
    %v1205 = vpop.permute.xlu0 %1204
    %vm1222 = vcmask 1048320
    %1223 = vst.msk [vmem:[#allocation2] sm:$0xff] %vm1222, %v1175
    %vm1224 = vcmask 1044224
    %1225 = vst.msk [vmem:[#allocation2 + $0x10] sm:$0xf] %vm1224, %v1177
    %1226 = vst.msk [vmem:[#allocation2 + $0x20] sm:$0xff] %vm1222, %v1179
    %1227 = vst.msk [vmem:[#allocation2 + $0x30] sm:$0xf] %vm1224, %v1181
    %1228 = vst.msk [vmem:[#allocation2 + $0x40] sm:$0xff] %vm1222, %v1183
    %1229 = vst.msk [vmem:[#allocation2 + $0x50] sm:$0xf] %vm1224, %v1185
    %1230 = vst.msk [vmem:[#allocation2 + $0x60] sm:$0xff] %vm1222, %v1187
    %1231 = vst.msk [vmem:[#allocation2 + $0x70] sm:$0xf] %vm1224, %v1189
    %1232 = vst.msk [vmem:[#allocation2 + $0x80] sm:$0xff] %vm1222, %v1191
    %1233 = vst.msk [vmem:[#allocation2 + $0x90] sm:$0xf] %vm1224, %v1193
    %1234 = vst.msk [vmem:[#allocation2 + $0xa0] sm:$0xff] %vm1222, %v1195
    %1235 = vst.msk [vmem:[#allocation2 + $0xb0] sm:$0xf] %vm1224, %v1197
    %1236 = vst.msk [vmem:[#allocation2 + $0xc0] sm:$0xff] %vm1222, %v1199
    %1237 = vst.msk [vmem:[#allocation2 + $0xd0] sm:$0xf] %vm1224, %v1201
    %1238 = vst.msk [vmem:[#allocation2 + $0xe0] sm:$0xff] %vm1222, %v1203
    %1239 = vst.msk [vmem:[#allocation2 + $0xf0] sm:$0xf] %vm1224, %v1205
    %vm1240 = vcmask 1043456
    %v1241 = vrot.slane %v693, 4
    %v1242 = vrot.slane %v694, 4
    %v1243 = vsel %vm1240, %v1241, %v1242
    %v1244 = vrot.slane %v725, 4
    %v1245 = vrot.slane %v726, 4
    %v1246 = vsel %vm1240, %v1244, %v1245
    %v1247 = vrot.slane %v757, 4
    %v1248 = vrot.slane %v758, 4
    %v1249 = vsel %vm1240, %v1247, %v1248
    %v1250 = vrot.slane %v789, 4
    %v1251 = vrot.slane %v790, 4
    %v1252 = vsel %vm1240, %v1250, %v1251
    %v1253 = vrot.slane %v821, 4
    %v1254 = vrot.slane %v822, 4
    %v1255 = vsel %vm1240, %v1253, %v1254
    %v1256 = vrot.slane %v853, 4
    %v1257 = vrot.slane %v854, 4
    %v1258 = vsel %vm1240, %v1256, %v1257
    %v1259 = vrot.slane %v885, 4
    %v1260 = vrot.slane %v886, 4
    %v1261 = vsel %vm1240, %v1259, %v1260
    %v1262 = vrot.slane %v917, 4
    %v1263 = vrot.slane %v918, 4
    %v1264 = vsel %vm1240, %v1262, %v1263
    %1281 = vst.msk [vmem:[#allocation2 + $0x8] sm:$0xff] %vm933, %v1243
    %1282 = vst.msk [vmem:[#allocation2 + $0x18] sm:$0xf] %vm935, %v1242
    %1283 = vst.msk [vmem:[#allocation2 + $0x28] sm:$0xff] %vm933, %v1246
    %1284 = vst.msk [vmem:[#allocation2 + $0x38] sm:$0xf] %vm935, %v1245
    %1285 = vst.msk [vmem:[#allocation2 + $0x48] sm:$0xff] %vm933, %v1249
    %1286 = vst.msk [vmem:[#allocation2 + $0x58] sm:$0xf] %vm935, %v1248
    %1287 = vst.msk [vmem:[#allocation2 + $0x68] sm:$0xff] %vm933, %v1252
    %1288 = vst.msk [vmem:[#allocation2 + $0x78] sm:$0xf] %vm935, %v1251
    %1289 = vst.msk [vmem:[#allocation2 + $0x88] sm:$0xff] %vm933, %v1255
    %1290 = vst.msk [vmem:[#allocation2 + $0x98] sm:$0xf] %vm935, %v1254
    %1291 = vst.msk [vmem:[#allocation2 + $0xa8] sm:$0xff] %vm933, %v1258
    %1292 = vst.msk [vmem:[#allocation2 + $0xb8] sm:$0xf] %vm935, %v1257
    %1293 = vst.msk [vmem:[#allocation2 + $0xc8] sm:$0xff] %vm933, %v1261
    %1294 = vst.msk [vmem:[#allocation2 + $0xd8] sm:$0xf] %vm935, %v1260
    %1295 = vst.msk [vmem:[#allocation2 + $0xe8] sm:$0xff] %vm933, %v1264
    %1296 = vst.msk [vmem:[#allocation2 + $0xf8] sm:$0xf] %vm935, %v1263
    %1297 = vst [vmem:[#allocation2 + $0x10] sm:$0xf0] 0.0
    %vm1298 = vcmask 261124
    %1299 = vst.msk [vmem:[#allocation2 + $0x18] sm:$0xf0] %vm1298, 0.0
    %1300 = vst [vmem:[#allocation2 + $0x30] sm:$0xf0] 0.0
    %1301 = vst.msk [vmem:[#allocation2 + $0x38] sm:$0xf0] %vm1298, 0.0
    %1302 = vst [vmem:[#allocation2 + $0x50] sm:$0xf0] 0.0
    %1303 = vst.msk [vmem:[#allocation2 + $0x58] sm:$0xf0] %vm1298, 0.0
    %1304 = vst [vmem:[#allocation2 + $0x70] sm:$0xf0] 0.0
    %1305 = vst.msk [vmem:[#allocation2 + $0x78] sm:$0xf0] %vm1298, 0.0
    %1306 = vst [vmem:[#allocation2 + $0x90] sm:$0xf0] 0.0
    %1307 = vst.msk [vmem:[#allocation2 + $0x98] sm:$0xf0] %vm1298, 0.0
    %1308 = vst [vmem:[#allocation2 + $0xb0] sm:$0xf0] 0.0
    %1309 = vst.msk [vmem:[#allocation2 + $0xb8] sm:$0xf0] %vm1298, 0.0
    %1310 = vst [vmem:[#allocation2 + $0xd0] sm:$0xf0] 0.0
    %1311 = vst.msk [vmem:[#allocation2 + $0xd8] sm:$0xf0] %vm1298, 0.0
    %1312 = vst [vmem:[#allocation2 + $0xf0] sm:$0xf0] 0.0
    %1313 = vst.msk [vmem:[#allocation2 + $0xf8] sm:$0xf0] %vm1298, 0.0
    %v1314 = vld [vmem:[#allocation2] sm:$0xff]
    %v1315 = vld [vmem:[#allocation2 + $0x8] sm:$0xff]
    %v1316 = vld [vmem:[#allocation2 + $0x10] sm:$0xff]
    %v1317 = vld [vmem:[#allocation2 + $0x18] sm:$0xff]
    %v1318 = vld [vmem:[#allocation2 + $0x20] sm:$0xff]
    %v1319 = vld [vmem:[#allocation2 + $0x28] sm:$0xff]
    %v1320 = vld [vmem:[#allocation2 + $0x30] sm:$0xff]
    %v1321 = vld [vmem:[#allocation2 + $0x38] sm:$0xff]
    %v1322 = vld [vmem:[#allocation2 + $0x40] sm:$0xff]
    %v1323 = vld [vmem:[#allocation2 + $0x48] sm:$0xff]
    %v1324 = vld [vmem:[#allocation2 + $0x50] sm:$0xff]
    %v1325 = vld [vmem:[#allocation2 + $0x58] sm:$0xff]
    %v1326 = vld [vmem:[#allocation2 + $0x60] sm:$0xff]
    %v1327 = vld [vmem:[#allocation2 + $0x68] sm:$0xff]
    %v1328 = vld [vmem:[#allocation2 + $0x70] sm:$0xff]
    %v1329 = vld [vmem:[#allocation2 + $0x78] sm:$0xff]
    %v1330 = vld [vmem:[#allocation2 + $0x80] sm:$0xff]
    %v1331 = vld [vmem:[#allocation2 + $0x88] sm:$0xff]
    %v1332 = vld [vmem:[#allocation2 + $0x90] sm:$0xff]
    %v1333 = vld [vmem:[#allocation2 + $0x98] sm:$0xff]
    %v1334 = vld [vmem:[#allocation2 + $0xa0] sm:$0xff]
    %v1335 = vld [vmem:[#allocation2 + $0xa8] sm:$0xff]
    %v1336 = vld [vmem:[#allocation2 + $0xb0] sm:$0xff]
    %v1337 = vld [vmem:[#allocation2 + $0xb8] sm:$0xff]
    %v1338 = vld [vmem:[#allocation2 + $0xc0] sm:$0xff]
    %v1339 = vld [vmem:[#allocation2 + $0xc8] sm:$0xff]
    %v1340 = vld [vmem:[#allocation2 + $0xd0] sm:$0xff]
    %v1341 = vld [vmem:[#allocation2 + $0xd8] sm:$0xff]
    %v1342 = vld [vmem:[#allocation2 + $0xe0] sm:$0xff]
    %v1343 = vld [vmem:[#allocation2 + $0xe8] sm:$0xff]
    %v1344 = vld [vmem:[#allocation2 + $0xf0] sm:$0xff]
    %v1345 = vld [vmem:[#allocation2 + $0xf8] sm:$0xff]
    %v1346 = vld [vmem:[#allocation6] sm:$0xff]
    %v1347 = vld [vmem:[#allocation6 + $0x8] sm:$0xff]
    %v1348 = vld [vmem:[#allocation6 + $0x10] sm:$0xff]
    %v1349 = vld [vmem:[#allocation6 + $0x18] sm:$0xff]
    %v1350 = vld [vmem:[#allocation6 + $0x20] sm:$0xff]
    %v1351 = vld [vmem:[#allocation6 + $0x28] sm:$0xff]
    %v1352 = vld [vmem:[#allocation6 + $0x30] sm:$0xff]
    %v1353 = vld [vmem:[#allocation6 + $0x38] sm:$0xff]
    %v1354 = vld [vmem:[#allocation6 + $0x40] sm:$0xff]
    %v1355 = vld [vmem:[#allocation6 + $0x48] sm:$0xff]
    %v1356 = vld [vmem:[#allocation6 + $0x50] sm:$0xff]
    %v1357 = vld [vmem:[#allocation6 + $0x58] sm:$0xff]
    %v1358 = vld [vmem:[#allocation6 + $0x60] sm:$0xff]
    %v1359 = vld [vmem:[#allocation6 + $0x68] sm:$0xff]
    %v1360 = vld [vmem:[#allocation6 + $0x70] sm:$0xff]
    %v1361 = vld [vmem:[#allocation6 + $0x78] sm:$0xff]
    %v1362 = vld [vmem:[#allocation6 + $0x80] sm:$0xff]
    %v1363 = vld [vmem:[#allocation6 + $0x88] sm:$0xff]
    %v1364 = vld [vmem:[#allocation6 + $0x90] sm:$0xff]
    %v1365 = vld [vmem:[#allocation6 + $0x98] sm:$0xff]
    %v1367 = vsel %vm933, %v1315, 0
    %v1370 = vsel %vm933, %v1317, 0
    %v1373 = vsel %vm933, %v1319, 0
    %v1376 = vsel %vm933, %v1321, 0
    %v1379 = vsel %vm933, %v1323, 0
    %v1382 = vsel %vm933, %v1325, 0
    %v1385 = vsel %vm933, %v1327, 0
    %v1388 = vsel %vm933, %v1329, 0
    %v1391 = vsel %vm933, %v1331, 0
    %v1394 = vsel %vm933, %v1333, 0
    %v1397 = vsel %vm933, %v1335, 0
    %v1400 = vsel %vm933, %v1337, 0
    %v1403 = vsel %vm933, %v1339, 0
    %v1406 = vsel %vm933, %v1341, 0
    %v1409 = vsel %vm933, %v1343, 0
    %v1412 = vsel %vm933, %v1345, 0
    %1414 = vmatprep.subr.mxu0 0.0
    %1415 = vmatpush1.msra.mxu0 %v1346
    %1416 = vmatprep.subr.mxu0 0.0
    %1417 = vmatpush1.msra.mxu0 %v1347
    %1418 = vmatprep.subr.mxu0 0.0
    %1419 = vmatpush1.msra.mxu0 %v1348
    %1420 = vmatprep.subr.mxu0 0.0
    %1421 = vmatpush1.msra.mxu0 %v1349
    %1422 = vmatprep.subr.mxu0 0.0
    %1423 = vmatpush1.msra.mxu0 %v1350
    %1424 = vmatprep.subr.mxu0 0.0
    %1425 = vmatpush1.msra.mxu0 %v1351
    %1426 = vmatprep.subr.mxu0 0.0
    %1427 = vmatpush1.msra.mxu0 %v1352
    %1428 = vmatprep.subr.mxu0 0.0
    %1429 = vmatpush1.msra.mxu0 %v1353
    %1430 = vmatprep.subr.mxu0 0.0
    %1431 = vmatpush1.msra.mxu0 %v1354
    %1432 = vmatprep.subr.mxu0 0.0
    %1433 = vmatpush1.msra.mxu0 %v1355
    %1434 = vmatprep.subr.mxu0 0.0
    %1435 = vmatpush1.msra.mxu0 %v1356
    %1436 = vmatprep.subr.mxu0 0.0
    %1437 = vmatpush1.msra.mxu0 %v1357
    %1438 = vmatprep.subr.mxu0 0.0
    %1439 = vmatpush1.msra.mxu0 %v1358
    %1440 = vmatprep.subr.mxu0 0.0
    %1441 = vmatpush1.msra.mxu0 %v1359
    %1442 = vmatprep.subr.mxu0 0.0
    %1443 = vmatpush1.msra.mxu0 %v1360
    %1444 = vmatprep.subr.mxu0 0.0
    %1445 = vmatpush1.msra.mxu0 %v1361
    %1446 = vmatprep.subr.mxu0 0.0
    %1447 = vmatpush1.msra.mxu0 %v1362
    %1448 = vmatprep.subr.mxu0 0.0
    %1449 = vmatpush1.msra.mxu0 %v1363
    %1450 = vmatprep.subr.mxu0 0.0
    %1451 = vmatpush1.msra.mxu0 %v1364
    %1452 = vmatprep.subr.mxu0 0.0
    %1453 = vmatpush1.msra.mxu0 %v1365
    %1454 = vmatprep.subr.mxu0 0.0
    %1455 = vmatpush1.msra.mxu0 0.0
    %1456 = vmatprep.subr.mxu0 0.0
    %1457 = vmatpush1.msra.mxu0 0.0
    %1458 = vmatprep.subr.mxu0 0.0
    %1459 = vmatpush1.msra.mxu0 0.0
    %1460 = vmatprep.subr.mxu0 0.0
    %1461 = vmatpush1.msra.mxu0 0.0
    %1462 = vmatprep.subr.mxu0 0.0
    %1463 = vmatpush1.msra.mxu0 0.0
    %1464 = vmatprep.subr.mxu0 0.0
    %1465 = vmatpush1.msra.mxu0 0.0
    %1466 = vmatprep.subr.mxu0 0.0
    %1467 = vmatpush1.msra.mxu0 0.0
    %1468 = vmatprep.subr.mxu0 0.0
    %1469 = vmatpush1.msra.mxu0 0.0
    %1470 = vmatprep.subr.mxu0 0.0
    %1471 = vmatpush1.msra.mxu0 0.0
    %1472 = vmatprep.subr.mxu0 0.0
    %1473 = vmatpush1.msra.mxu0 0.0
    %1474 = vmatprep.subr.mxu0 0.0
    %1475 = vmatpush1.msra.mxu0 0.0
    %1476 = vmatprep.subr.mxu0 0.0
    %1477 = vmatpush1.msra.mxu0 0.0
    %1478 = vmatprep.mubr.f32.mxu0 %v1367
    %1479 = vmatmul.mubr.f32.gmra.mrb[0].mxu0 %v1314
    %v1480 = vpop.f32.mrb[0].mxu0
    %v1481 = vadd.f32 0.0, %v1480
    %v1482 = vpop.f32.mrb[0].mxu0
    %1483 = vmatprep.mubr.f32.mxu0 %v1370
    %1484 = vmatmul.mubr.f32.gmra.mrb[0].mxu0 %v1316
    %v1485 = vpop.f32.mrb[0].mxu0
    %v1486 = vadd.f32 0.0, %v1485
    %v1487 = vpop.f32.mrb[0].mxu0
    %1488 = vmatprep.mubr.f32.mxu0 %v1373
    %1489 = vmatmul.mubr.f32.gmra.mrb[0].mxu0 %v1318
    %v1490 = vpop.f32.mrb[0].mxu0
    %v1491 = vadd.f32 0.0, %v1490
    %v1492 = vpop.f32.mrb[0].mxu0
    %1493 = vmatprep.mubr.f32.mxu0 %v1376
    %1494 = vmatmul.mubr.f32.gmra.mrb[0].mxu0 %v1320
    %v1495 = vpop.f32.mrb[0].mxu0
    %v1496 = vadd.f32 0.0, %v1495
    %v1497 = vpop.f32.mrb[0].mxu0
    %1498 = vmatprep.mubr.f32.mxu0 %v1379
    %1499 = vmatmul.mubr.f32.gmra.mrb[0].mxu0 %v1322
    %v1500 = vpop.f32.mrb[0].mxu0
    %v1501 = vadd.f32 0.0, %v1500
    %v1502 = vpop.f32.mrb[0].mxu0
    %1503 = vmatprep.mubr.f32.mxu0 %v1382
    %1504 = vmatmul.mubr.f32.gmra.mrb[0].mxu0 %v1324
    %v1505 = vpop.f32.mrb[0].mxu0
    %v1506 = vadd.f32 0.0, %v1505
    %v1507 = vpop.f32.mrb[0].mxu0
    %1508 = vmatprep.mubr.f32.mxu0 %v1385
    %1509 = vmatmul.mubr.f32.gmra.mrb[0].mxu0 %v1326
    %v1510 = vpop.f32.mrb[0].mxu0
    %v1511 = vadd.f32 0.0, %v1510
    %v1512 = vpop.f32.mrb[0].mxu0
    %1513 = vmatprep.mubr.f32.mxu0 %v1388
    %1514 = vmatmul.mubr.f32.gmra.mrb[0].mxu0 %v1328
    %v1515 = vpop.f32.mrb[0].mxu0
    %v1516 = vadd.f32 0.0, %v1515
    %v1517 = vpop.f32.mrb[0].mxu0
    %1518 = vmatprep.mubr.f32.mxu0 %v1391
    %1519 = vmatmul.mubr.f32.gmra.mrb[0].mxu0 %v1330
    %v1520 = vpop.f32.mrb[0].mxu0
    %v1521 = vadd.f32 0.0, %v1520
    %v1522 = vpop.f32.mrb[0].mxu0
    %1523 = vmatprep.mubr.f32.mxu0 %v1394
    %1524 = vmatmul.mubr.f32.gmra.mrb[0].mxu0 %v1332
    %v1525 = vpop.f32.mrb[0].mxu0
    %v1526 = vadd.f32 0.0, %v1525
    %v1527 = vpop.f32.mrb[0].mxu0
    %1528 = vmatprep.mubr.f32.mxu0 %v1397
    %1529 = vmatmul.mubr.f32.gmra.mrb[0].mxu0 %v1334
    %v1530 = vpop.f32.mrb[0].mxu0
    %v1531 = vadd.f32 0.0, %v1530
    %v1532 = vpop.f32.mrb[0].mxu0
    %1533 = vmatprep.mubr.f32.mxu0 %v1400
    %1534 = vmatmul.mubr.f32.gmra.mrb[0].mxu0 %v1336
    %v1535 = vpop.f32.mrb[0].mxu0
    %v1536 = vadd.f32 0.0, %v1535
    %v1537 = vpop.f32.mrb[0].mxu0
    %1538 = vmatprep.mubr.f32.mxu0 %v1403
    %1539 = vmatmul.mubr.f32.gmra.mrb[0].mxu0 %v1338
    %v1540 = vpop.f32.mrb[0].mxu0
    %v1541 = vadd.f32 0.0, %v1540
    %v1542 = vpop.f32.mrb[0].mxu0
    %1543 = vmatprep.mubr.f32.mxu0 %v1406
    %1544 = vmatmul.mubr.f32.gmra.mrb[0].mxu0 %v1340
    %v1545 = vpop.f32.mrb[0].mxu0
    %v1546 = vadd.f32 0.0, %v1545
    %v1547 = vpop.f32.mrb[0].mxu0
    %1548 = vmatprep.mubr.f32.mxu0 %v1409
    %1549 = vmatmul.mubr.f32.gmra.mrb[0].mxu0 %v1342
    %v1550 = vpop.f32.mrb[0].mxu0
    %v1551 = vadd.f32 0.0, %v1550
    %v1552 = vpop.f32.mrb[0].mxu0
    %1553 = vmatprep.mubr.f32.mxu0 %v1412
    %1554 = vmatmul.mubr.f32.gmra.mrb[0].mxu0 %v1344
    %v1555 = vpop.f32.mrb[0].mxu0
    %v1556 = vadd.f32 0.0, %v1555
    %v1557 = vpop.f32.mrb[0].mxu0
    %1558 = vdwg.mxu0
    %v1559 = vlaneseq
    %v1560 = vshrl.u32 %v1559, 7
    %v1561 = vadd.s32 %v1560, 8
    %vm1562 = vcmp.lt.s32.totalorder %v1560, 12
    %vm1563 = vcmp.lt.s32.totalorder %v1561, 12
    %v1564 = vsel %vm1562, %v1481, -inf
    %v1565 = vsel %vm1563, %v1486, -inf
    %v1566 = vsel %vm1562, %v1491, -inf
    %v1567 = vsel %vm1563, %v1496, -inf
    %v1568 = vsel %vm1562, %v1501, -inf
    %v1569 = vsel %vm1563, %v1506, -inf
    %v1570 = vsel %vm1562, %v1511, -inf
    %v1571 = vsel %vm1563, %v1516, -inf
    %v1572 = vsel %vm1562, %v1521, -inf
    %v1573 = vsel %vm1563, %v1526, -inf
    %v1574 = vsel %vm1562, %v1531, -inf
    %v1575 = vsel %vm1563, %v1536, -inf
    %v1576 = vsel %vm1562, %v1541, -inf
    %v1577 = vsel %vm1563, %v1546, -inf
    %v1578 = vsel %vm1562, %v1551, -inf
    %v1579 = vsel %vm1563, %v1556, -inf
    %v1580 = vmax.f32 %v1564, %v1565
    %v1581 = vrot.slane %v1580, 4
    %v1582 = vmax.f32 %v1580, %v1581
    %v1583 = vrot.slane %v1582, 2
    %v1584 = vmax.f32 %v1582, %v1583
    %v1585 = vrot.slane %v1584, 1
    %v1586 = vmax.f32 %v1584, %v1585
    %v1587 = vmax.f32 %v1566, %v1567
    %v1588 = vrot.slane %v1587, 4
    %v1589 = vmax.f32 %v1587, %v1588
    %v1590 = vrot.slane %v1589, 2
    %v1591 = vmax.f32 %v1589, %v1590
    %v1592 = vrot.slane %v1591, 1
    %v1593 = vmax.f32 %v1591, %v1592
    %v1594 = vmax.f32 %v1568, %v1569
    %v1595 = vrot.slane %v1594, 4
    %v1596 = vmax.f32 %v1594, %v1595
    %v1597 = vrot.slane %v1596, 2
    %v1598 = vmax.f32 %v1596, %v1597
    %v1599 = vrot.slane %v1598, 1
    %v1600 = vmax.f32 %v1598, %v1599
    %v1601 = vmax.f32 %v1570, %v1571
    %v1602 = vrot.slane %v1601, 4
    %v1603 = vmax.f32 %v1601, %v1602
    %v1604 = vrot.slane %v1603, 2
    %v1605 = vmax.f32 %v1603, %v1604
    %v1606 = vrot.slane %v1605, 1
    %v1607 = vmax.f32 %v1605, %v1606
    %v1608 = vmax.f32 %v1572, %v1573
    %v1609 = vrot.slane %v1608, 4
    %v1610 = vmax.f32 %v1608, %v1609
    %v1611 = vrot.slane %v1610, 2
    %v1612 = vmax.f32 %v1610, %v1611
    %v1613 = vrot.slane %v1612, 1
    %v1614 = vmax.f32 %v1612, %v1613
    %v1615 = vmax.f32 %v1574, %v1575
    %v1616 = vrot.slane %v1615, 4
    %v1617 = vmax.f32 %v1615, %v1616
    %v1618 = vrot.slane %v1617, 2
    %v1619 = vmax.f32 %v1617, %v1618
    %v1620 = vrot.slane %v1619, 1
    %v1621 = vmax.f32 %v1619, %v1620
    %v1622 = vmax.f32 %v1576, %v1577
    %v1623 = vrot.slane %v1622, 4
    %v1624 = vmax.f32 %v1622, %v1623
    %v1625 = vrot.slane %v1624, 2
    %v1626 = vmax.f32 %v1624, %v1625
    %v1627 = vrot.slane %v1626, 1
    %v1628 = vmax.f32 %v1626, %v1627
    %v1629 = vmax.f32 %v1578, %v1579
    %v1630 = vrot.slane %v1629, 4
    %v1631 = vmax.f32 %v1629, %v1630
    %v1632 = vrot.slane %v1631, 2
    %v1633 = vmax.f32 %v1631, %v1632
    %v1634 = vrot.slane %v1633, 1
    %v1635 = vmax.f32 %v1633, %v1634
    %v1636 = vld [vmem:[%s2] sm:$0x1]
    %v1638 = vlaneseq
    %v1639 = vshrl.u32 %v1638, 7
    %v1640 = vsub.s32 0, %v1639
    %v1641 = vrot.slane %v1636, %v1640
    %v1643 = vadd.f32 %v1586, %v1641
    %v1644 = vadd.f32 %v1593, %v1641
    %v1645 = vadd.f32 %v1600, %v1641
    %v1646 = vadd.f32 %v1607, %v1641
    %v1647 = vadd.f32 %v1614, %v1641
    %v1648 = vadd.f32 %v1621, %v1641
    %v1649 = vadd.f32 %v1628, %v1641
    %v1650 = vadd.f32 %v1635, %v1641
    %v1651 = vmax.f32 %v1643, 0.0
    %v1652 = vmax.f32 %v1644, 0.0
    %v1653 = vmax.f32 %v1645, 0.0
    %v1654 = vmax.f32 %v1646, 0.0
    %v1655 = vmax.f32 %v1647, 0.0
    %v1656 = vmax.f32 %v1648, 0.0
    %v1657 = vmax.f32 %v1649, 0.0
    %v1658 = vmax.f32 %v1650, 0.0
    %v1667 = vrot.slane %v1652, 7
    %vm1668 = vcmask 1041409
    %v1669 = vsel %vm1668, %v1667, %v1651
    %v1670 = vrot.slane %v1653, 6
    %vm1671 = vcmask 1042434
    %v1672 = vsel %vm1671, %v1670, %v1669
    %v1673 = vrot.slane %v1654, 5
    %vm1674 = vcmask 1043459
    %v1675 = vsel %vm1674, %v1673, %v1672
    %v1676 = vrot.slane %v1655, 4
    %vm1677 = vcmask 1044484
    %v1678 = vsel %vm1677, %v1676, %v1675
    %v1679 = vrot.slane %v1656, 3
    %vm1680 = vcmask 1045509
    %v1681 = vsel %vm1680, %v1679, %v1678
    %v1682 = vrot.slane %v1657, 2
    %vm1683 = vcmask 1046534
    %v1684 = vsel %vm1683, %v1682, %v1681
    %v1685 = vrot.slane %v1658, 1
    %vm1686 = vcmask 1047559
    %v1687 = vsel %vm1686, %v1685, %v1684
    %1689 = vst [vmem:[#allocation8] sm:$0xff] %v1687
    // Predicated region
    $region22: #{tpu_custom_call.1} parent=1 // pred_check
      _
    $region23: #{tpu_custom_call.1} parent=1 // pred_check_branch
      %1691 = sbr.rel (0) target = $region25
    $region24: #{tpu_custom_call.1} parent=1 // pred_region
      %s1693 = ssub.s32 128, 128
      %1694 = vsyncadd [#allocation5], %s1693
      %s1696 = sshll.u32 [#allocation8], 4
      %s1697 = int_to_ptr.vmem [resolvable:$true] %s1696
      %1699 = dma.vmem_to_hbm [thread:$0]  %s1697, 128, %s3, [#allocation5]
    $region25: #{tpu_custom_call.1} parent=1 // pred_fallthru
      _
    // Predicated region
    $region26: #{tpu_custom_call.1} parent=1 // pred_check
      _
    $region27: #{tpu_custom_call.1} parent=1 // pred_check_branch
      %1701 = sbr.rel (0) target = $region29
    $region28: #{tpu_custom_call.1} parent=1 // pred_region
      %1702 = dma.done [#allocation5], 128
    $region29: #{tpu_custom_call.1} parent=1 // pred_fallthru
      _
    %1703 = vsyncpa [#allocation4], 1
    %1704 = vsyncpa [#allocation7], 1
    %1705 = vsyncpa [#allocation5], 1

</llo_original>
